<compile_context>
chip_gen: v6e
topology: v6e:2x2x1
jax: 0.10.0
libtpu: 0.0.40
codegen_flags: <defaults>
</compile_context>

<pallas_src>
import functools
import math

import jax
import jax.numpy as jnp
from jax.experimental import pallas as pl
from jax.experimental.pallas import tpu as pltpu

EPS = 1e-5
GROUPS = 32
LANE = 128


# --------------------------------------------------------------------------
# small static helpers
# --------------------------------------------------------------------------
def _round_up(x, m):
    return (x + m - 1) // m * m


def _pick_tile(total, step, cap):
    """Largest multiple of `step` that divides `total` and is <= cap."""
    best = step
    t = step
    lim = min(total, cap)
    while t <= lim:
        if total % t == 0:
            best = t
        t += step
    return best


def _choose_m_tiling(M, cap):
    """Row-tile size and padded row count for an (M, C) operand."""
    Mp0 = _round_up(M, 8)
    if Mp0 <= cap:
        return Mp0, Mp0
    t = _pick_tile(Mp0, 8, cap)
    if t >= 128:
        return t, Mp0
    return cap, _round_up(M, cap)       # awkward M: pad instead of tiny tiles


def _ew_cap(Cp):
    """Row-tile cap for elementwise kernels: ~1 MiB (bf16) per streamed buffer,
    so the double-buffered working set stays well under the smallest (v7x)
    VMEM budget while blocks stay large enough to reach the HBM roofline."""
    return max(256, min(2048, (524288 // Cp) // 8 * 8))


def _pad_rows(x, Mp):
    M = x.shape[0]
    if Mp == M:
        return x
    return jnp.pad(x, ((0, Mp - M),) + ((0, 0),) * (x.ndim - 1))


# --------------------------------------------------------------------------
# Pallas kernels
# --------------------------------------------------------------------------
def _matmul_kernel(*args, affine, relu, m_valid, tm):
    """bf16 (tm,tk)@(tk,tn) with f32 scratch accumulation. Optionally applies a
    per-K-channel affine(+ReLU) to the A block (fusing the producer's BN into
    this conv).  On the last K step the bf16 output block and per-channel
    sum / sum-of-squares (for the consumer BN) are emitted."""
    if affine:
        a_ref, b_ref, scale_ref, shift_ref, o_ref, sum_ref, sq_ref, acc_ref = args
    else:
        a_ref, b_ref, o_ref, sum_ref, sq_ref, acc_ref = args

    @pl.when(pl.program_id(2) == 0)
    def _():
        acc_ref[...] = jnp.zeros_like(acc_ref)

    a = a_ref[...]
    if affine:
        a = a.astype(jnp.float32) * scale_ref[...] + shift_ref[...]
        if relu:
            a = jnp.maximum(a, 0.0)
        if m_valid is not None:                      # zero padded rows so the
            rows = pl.program_id(0) * tm + jax.lax.broadcasted_iota(
                jnp.int32, a.shape, 0)               # fused stats stay exact
            a = jnp.where(rows < m_valid, a, 0.0)
        a = a.astype(jnp.bfloat16)

    acc_ref[...] += jnp.dot(a, b_ref[...], preferred_element_type=jnp.float32)

    @pl.when(pl.program_id(2) == pl.num_programs(2) - 1)
    def _():
        acc = acc_ref[...]
        o_ref[...] = acc.astype(o_ref.dtype)
        sum_ref[...] = jnp.sum(acc, axis=0, keepdims=True)[None]
        sq_ref[...] = jnp.sum(acc * acc, axis=0, keepdims=True)[None]


def _tapconv_kernel(*args, n_phase, taps, rows, w_valid, w_period):
    """Shifted-tap conv: out[r] = sum_t phases[p_t][off_t + r] @ w[t], computed
    on contiguous row windows of flattened (image) slabs kept in VMEM -- no
    im2col.  Wrap-around junk columns (r % w_period >= w_valid) are masked to
    zero and excluded from the emitted per-channel BN stats."""
    xs = args[:n_phase]
    w_ref = args[n_phase]
    o_ref, sum_ref, sq_ref = args[n_phase + 1:]
    tn = o_ref.shape[-1]

    acc = jnp.zeros((rows, tn), jnp.float32)
    for t, (pi, off) in enumerate(taps):
        a = xs[pi][0, off:off + rows, :]
        acc = acc + jnp.dot(a, w_ref[t], preferred_element_type=jnp.float32)

    if w_valid != w_period:
        col = jax.lax.broadcasted_iota(jnp.int32, (rows, 1), 0) % w_period
        acc = jnp.where(col < w_valid, acc, 0.0)

    o_ref[0] = acc.astype(o_ref.dtype)
    sum_ref[...] = jnp.sum(acc, axis=0, keepdims=True)[None]
    sq_ref[...] = jnp.sum(acc * acc, axis=0, keepdims=True)[None]


def _bn_act_kernel(x_ref, scale_ref, shift_ref, o_ref, *, relu):
    y = x_ref[...].astype(jnp.float32) * scale_ref[...] + shift_ref[...]
    if relu:
        y = jnp.maximum(y, 0.0)
    o_ref[...] = y.astype(o_ref.dtype)


def _fused_residual_kernel(res_ref, s3_ref, b3_ref, sc_ref, dec_ref,
                           sd_ref, bd_ref, o_ref):
    # relu( bn3(res) + shortcut + bn_dec(decode) )
    y = (res_ref[...].astype(jnp.float32) * s3_ref[...] + b3_ref[...]
         + sc_ref[...].astype(jnp.float32)
         + dec_ref[...].astype(jnp.float32) * sd_ref[...] + bd_ref[...])
    o_ref[...] = jnp.maximum(y, 0.0)


def _stats_kernel(x_ref, sum_ref, sq_ref):
    """Standalone per-channel sum / sumsq pass (only used for the rare
    output_padding=0 decoder, whose cropped pixels invalidate the fused
    per-phase stats)."""
    @pl.when(pl.program_id(0) == 0)
    def _():
        sum_ref[...] = jnp.zeros_like(sum_ref)
        sq_ref[...] = jnp.zeros_like(sq_ref)
    x = x_ref[...].astype(jnp.float32)
    sum_ref[...] += jnp.sum(x, axis=0, keepdims=True)
    sq_ref[...] += jnp.sum(x * x, axis=0, keepdims=True)


# --------------------------------------------------------------------------
# Pallas wrappers
# --------------------------------------------------------------------------
def matmul_pallas(a, b, *, scale=None, shift=None, relu=False):
    """(M,K)@(K,N) -> (bf16 (M,N), chan_sum (N,), chan_sumsq (N,)).
    a: bf16 activation slab; b: bf16 weight (K, N multiples of 128).
    Optional fused affine(+ReLU) on A (the producer's BN)."""
    M, K = a.shape
    Kb, N = b.shape
    assert K == Kb and K % LANE == 0 and N % LANE == 0
    tm, Mp = _choose_m_tiling(M, 256)
    tk = _pick_tile(K, LANE, 1024)
    tn = _pick_tile(N, LANE, 512)
    n_i, n_j, n_k = Mp // tm, N // tn, K // tk
    ap = _pad_rows(a, Mp)

    affine = scale is not None
    m_valid = M if (affine and Mp != M) else None

    in_specs = [pl.BlockSpec((tm, tk), lambda i, j, k: (i, k)),
                pl.BlockSpec((tk, tn), lambda i, j, k: (k, j))]
    ops = [ap, b]
    if affine:
        in_specs += [pl.BlockSpec((1, tk), lambda i, j, k: (0, k)),
                     pl.BlockSpec((1, tk), lambda i, j, k: (0, k))]
        ops += [scale.reshape(1, K), shift.reshape(1, K)]

    out, ssum, ssq = pl.pallas_call(
        functools.partial(_matmul_kernel, affine=affine, relu=relu,
                          m_valid=m_valid, tm=tm),
        out_shape=(jax.ShapeDtypeStruct((Mp, N), jnp.bfloat16),
                   jax.ShapeDtypeStruct((n_i, 1, N), jnp.float32),
                   jax.ShapeDtypeStruct((n_i, 1, N), jnp.float32)),
        grid_spec=pltpu.PrefetchScalarGridSpec(
            num_scalar_prefetch=0,
            grid=(n_i, n_j, n_k),
            in_specs=in_specs,
            out_specs=(pl.BlockSpec((tm, tn), lambda i, j, k: (i, j)),
                       pl.BlockSpec((1, 1, tn), lambda i, j, k: (i, 0, j)),
                       pl.BlockSpec((1, 1, tn), lambda i, j, k: (i, 0, j))),
            scratch_shapes=[pltpu.VMEM((tm, tn), jnp.float32)]),
        compiler_params=pltpu.CompilerParams(
            dimension_semantics=("parallel", "parallel", "arbitrary")),
    )(*ops)
    out = out[:M] if Mp != M else out
    return out, jnp.sum(ssum, axis=(0, 1)), jnp.sum(ssq, axis=(0, 1))


def tapconv_pallas(phases, w, taps, *, rows, w_valid, w_period):
    """Generic shifted-tap conv.  phases: list of (N, Lin, Cin_p) bf16 slabs;
    w: (n_taps, Cin_p, Cout_p) bf16; taps: list of (phase_idx, row_offset).
    Returns (bf16 (N, rows, Cout_p), chan_sum, chan_sumsq)."""
    n_batch = phases[0].shape[0]
    Cin_p = w.shape[1]
    Cout_p = w.shape[-1]
    tn = _pick_tile(Cout_p, LANE, 512)
    n_j = Cout_p // tn

    in_specs = [pl.BlockSpec((1,) + p.shape[1:], lambda n, j: (n, 0, 0))
                for p in phases]
    in_specs.append(
        pl.BlockSpec((w.shape[0], Cin_p, tn), lambda n, j: (0, 0, j)))

    out, ssum, ssq = pl.pallas_call(
        functools.partial(_tapconv_kernel, n_phase=len(phases),
                          taps=tuple(taps), rows=rows,
                          w_valid=w_valid, w_period=w_period),
        out_shape=(jax.ShapeDtypeStruct((n_batch, rows, Cout_p), jnp.bfloat16),
                   jax.ShapeDtypeStruct((n_batch, 1, Cout_p), jnp.float32),
                   jax.ShapeDtypeStruct((n_batch, 1, Cout_p), jnp.float32)),
        grid_spec=pltpu.PrefetchScalarGridSpec(
            num_scalar_prefetch=0,
            grid=(n_batch, n_j),
            in_specs=in_specs,
            out_specs=(pl.BlockSpec((1, rows, tn), lambda n, j: (n, 0, j)),
                       pl.BlockSpec((1, 1, tn), lambda n, j: (n, 0, j)),
                       pl.BlockSpec((1, 1, tn), lambda n, j: (n, 0, j)))),
        compiler_params=pltpu.CompilerParams(
            dimension_semantics=("parallel", "parallel")),
    )(*phases, w)
    return out, jnp.sum(ssum, axis=(0, 1)), jnp.sum(ssq, axis=(0, 1))


def conv3x3_pallas(x4, w, *, stride):
    """3x3 conv (pad 1, stride 1 or 2) on a lane-padded NHWC bf16 tensor via
    shifted-tap accumulation (no im2col).  w: (9, Cin_p, Cout_p) bf16, taps in
    (kh, kw) row-major order.  Returns (bf16 (N,Ho,Wo,Cout_p), sum, sumsq)."""
    assert stride in (1, 2)
    N, H, W, C = x4.shape
    Ho = (H - 1) // stride + 1
    Wo = (W - 1) // stride + 1

    if stride == 1:
        xp = jnp.pad(x4, ((0, 0), (1, 1), (1, 1), (0, 0)))
        Hp, Wp = H + 2, W + 2
        flat = xp.reshape(N, Hp * Wp, C)
        rows = Ho * Wp
        need = 2 * Wp + 2 + rows                 # end of the last tap window
        if need > Hp * Wp:
            flat = jnp.pad(flat, ((0, 0), (0, need - Hp * Wp), (0, 0)))
        phases = [flat]
        taps = [(0, kh * Wp + kw) for kh in range(3) for kw in range(3)]
        w_period = Wp
    else:
        # stride 2: split the padded image into the 4 row/col parity phases so
        # every tap is a plain (unstrided) contiguous row window of a phase.
        pb, pr = 1 + (H % 2), 1 + (W % 2)
        xp = jnp.pad(x4, ((0, 0), (1, pb), (1, pr), (0, 0)))
        Hh, Wh = (H + 1 + pb) // 2, (W + 1 + pr) // 2      # == Ho+1, Wo+1
        phases = [xp[:, p::2, q::2, :].reshape(N, Hh * Wh, C)
                  for p in range(2) for q in range(2)]
        rows = Ho * Wh
        need = Wh + 1 + rows
        if need > Hh * Wh:
            phases = [jnp.pad(p, ((0, 0), (0, need - Hh * Wh), (0, 0)))
                      for p in phases]
        taps = [(2 * (kh % 2) + (kw % 2), (kh // 2) * Wh + (kw // 2))
                for kh in range(3) for kw in range(3)]
        w_period = Wh

    out, ssum, ssq = tapconv_pallas(phases, w, taps, rows=rows,
                                    w_valid=Wo, w_period=w_period)
    Cout_p = w.shape[-1]
    out4 = out.reshape(N, Ho, w_period, Cout_p)[:, :, :Wo, :]
    return out4, ssum, ssq


# --------------------------------------------------------------------------
# decoder: grouped stride-2 ConvTranspose via 4-phase decomposition
# --------------------------------------------------------------------------
# phase (ry, rx) -> taps (dy, dx, th, tw): out[2i+ry, 2j+rx] += x[i+dy, j+dx] @ Wt[th, tw]
_DEC_TAPS = (
    ((0, 0), ((0, 0, 1, 1),)),
    ((0, 1), ((0, 0, 1, 2), (0, 1, 1, 0))),
    ((1, 0), ((0, 0, 2, 1), (1, 0, 0, 1))),
    ((1, 1), ((0, 0, 2, 2), (0, 1, 2, 0), (1, 0, 0, 2), (1, 1, 0, 0))),
)


def decoder_pallas(encode4, w_dec_taps, *, out_pad):
    """Grouped ConvTranspose2d(k=3, s=2, p=1, output_padding=out_pad), phase
    decomposed (no zero-upsampling, no zero-filled scatter buffer).  Returns
    (bf16 (N, Ho, Wo, Cout_p), chan_sum, chan_sumsq) -- stats are None for
    out_pad=0 (cropped pixels; caller recomputes them)."""
    N, He, We, C = encode4.shape
    Ho, Wo = 2 * He - 1 + out_pad, 2 * We - 1 + out_pad
    xe = jnp.pad(encode4, ((0, 0), (0, 1), (0, 1), (0, 0)))   # bottom/right
    Wh = We + 1
    flat = xe.reshape(N, (He + 1) * Wh, C)
    rows = He * Wh
    need = (Wh + 1) + rows
    if need > (He + 1) * Wh:
        flat = jnp.pad(flat, ((0, 0), (0, need - (He + 1) * Wh), (0, 0)))

    phase_out = {}
    tot_sum, tot_sq = 0.0, 0.0
    for (ry, rx), taps in _DEC_TAPS:
        tap_offs = [(0, dy * Wh + dx) for dy, dx, _, _ in taps]
        w = w_dec_taps[(ry, rx)]
        out, ssum, ssq = tapconv_pallas([flat], w, tap_offs, rows=rows,
                                        w_valid=We, w_period=Wh)
        Cout_p = w.shape[-1]
        phase_out[(ry, rx)] = out.reshape(N, He, Wh, Cout_p)[:, :, :We, :]
        tot_sum = tot_sum + ssum
        tot_sq = tot_sq + ssq

    # interleave: dec[n, 2i+ry, 2j+rx] = phase[(ry,rx)][n, i, j]
    rows_ry = [jnp.stack([phase_out[(ry, 0)], phase_out[(ry, 1)]], axis=3)
               for ry in (0, 1)]                              # (N,He,We,2,C)
    dec = jnp.stack(rows_ry, axis=2)                          # (N,He,2,We,2,C)
    Cout_p = dec.shape[-1]
    dec = dec.reshape(N, 2 * He, 2 * We, Cout_p)[:, :Ho, :Wo, :]
    if out_pad == 1:
        return dec, tot_sum, tot_sq
    return dec, None, None


# --------------------------------------------------------------------------
# BatchNorm helpers (training mode: batch stats, biased variance)
# --------------------------------------------------------------------------
def _affine_from_stats(ssum, ssq, count, gamma_p, beta_p):
    mean = ssum / count
    var = jnp.maximum(ssq / count - mean * mean, 0.0)
    scale = gamma_p * jax.lax.rsqrt(var + EPS)
    shift = beta_p - mean * scale
    return scale, shift


def bn_apply(y, scale, shift, *, relu):
    """Single-pass BN affine (+ReLU) on a (M, Cp) bf16 slab -> bf16 slab."""
    M, Cp = y.shape
    tm, Mp = _choose_m_tiling(M, _ew_cap(Cp))
    yp = _pad_rows(y, Mp)
    out = pl.pallas_call(
        functools.partial(_bn_act_kernel, relu=relu),
        out_shape=jax.ShapeDtypeStruct((Mp, Cp), jnp.bfloat16),
        grid_spec=pltpu.PrefetchScalarGridSpec(
            num_scalar_prefetch=0,
            grid=(Mp // tm,),
            in_specs=[pl.BlockSpec((tm, Cp), lambda i: (i, 0)),
                      pl.BlockSpec((1, Cp), lambda i: (0, 0)),
                      pl.BlockSpec((1, Cp), lambda i: (0, 0))],
            out_specs=pl.BlockSpec((tm, Cp), lambda i: (i, 0))),
        compiler_params=pltpu.CompilerParams(
            dimension_semantics=("parallel",)),
    )(yp, scale.reshape(1, Cp), shift.reshape(1, Cp))
    return out[:M] if Mp != M else out


def fused_residual(res, s3, b3, shortcut, dec, sd, bd):
    """relu( bn3(res) + shortcut + bn_dec(dec) ) over (M, Cp) slabs (f32 out)."""
    M, Cp = res.shape
    tm, Mp = _choose_m_tiling(M, _ew_cap(Cp))
    out = pl.pallas_call(
        _fused_residual_kernel,
        out_shape=jax.ShapeDtypeStruct((Mp, Cp), jnp.float32),
        grid_spec=pltpu.PrefetchScalarGridSpec(
            num_scalar_prefetch=0,
            grid=(Mp // tm,),
            in_specs=[pl.BlockSpec((tm, Cp), lambda i: (i, 0)),
                      pl.BlockSpec((1, Cp), lambda i: (0, 0)),
                      pl.BlockSpec((1, Cp), lambda i: (0, 0)),
                      pl.BlockSpec((tm, Cp), lambda i: (i, 0)),
                      pl.BlockSpec((tm, Cp), lambda i: (i, 0)),
                      pl.BlockSpec((1, Cp), lambda i: (0, 0)),
                      pl.BlockSpec((1, Cp), lambda i: (0, 0))],
            out_specs=pl.BlockSpec((tm, Cp), lambda i: (i, 0))),
        compiler_params=pltpu.CompilerParams(
            dimension_semantics=("parallel",)),
    )(_pad_rows(res, Mp), s3.reshape(1, Cp), b3.reshape(1, Cp),
      _pad_rows(shortcut, Mp), _pad_rows(dec, Mp),
      sd.reshape(1, Cp), bd.reshape(1, Cp))
    return out[:M] if Mp != M else out


def channel_stats(y):
    """Standalone per-channel sum/sumsq over a (M, Cp) slab."""
    M, Cp = y.shape
    tm, Mp = _choose_m_tiling(M, _ew_cap(Cp))
    yp = _pad_rows(y, Mp)
    ssum, ssq = pl.pallas_call(
        _stats_kernel,
        out_shape=(jax.ShapeDtypeStruct((1, Cp), jnp.float32),
                   jax.ShapeDtypeStruct((1, Cp), jnp.float32)),
        grid_spec=pltpu.PrefetchScalarGridSpec(
            num_scalar_prefetch=0,
            grid=(Mp // tm,),
            in_specs=[pl.BlockSpec((tm, Cp), lambda i: (i, 0))],
            out_specs=(pl.BlockSpec((1, Cp), lambda i: (0, 0)),
                       pl.BlockSpec((1, Cp), lambda i: (0, 0)))),
        compiler_params=pltpu.CompilerParams(
            dimension_semantics=("arbitrary",)),
    )(yp)
    return ssum[0], ssq[0]


# --------------------------------------------------------------------------
# one-time parameter preparation (runs once, outside the jitted forward)
# --------------------------------------------------------------------------
def _pad_vec(v, cp):
    return jnp.pad(v.astype(jnp.float32), (0, cp - v.shape[0]))


def _prep_conv1x1_weight(w, cin_p, cout_p):
    cout, cin = w.shape[0], w.shape[1]
    wt = jnp.transpose(w[:, :, 0, 0], (1, 0))
    wt = jnp.pad(wt, ((0, cin_p - cin), (0, cout_p - cout)))
    return wt.astype(jnp.bfloat16)


def _prep_conv3x3_weight(w, cin_p, cout_p):
    """OIHW -> (9, cin_p, cout_p) bf16, taps in (kh, kw) row-major order."""
    cout, cin = w.shape[0], w.shape[1]
    wt = jnp.transpose(w, (2, 3, 1, 0)).reshape(9, cin, cout)
    wt = jnp.pad(wt, ((0, 0), (0, cin_p - cin), (0, cout_p - cout)))
    return wt.astype(jnp.bfloat16)


def _expand_grouped(w, groups):
    """(Cout, Cin_g, k, k) grouped conv weight -> block-diagonal dense weight."""
    cout, cin_g, kh, kw = w.shape
    cout_g = cout // groups
    full = jnp.zeros((cout, cin_g * groups, kh, kw), w.dtype)
    for g in range(groups):
        full = full.at[g * cout_g:(g + 1) * cout_g,
                       g * cin_g:(g + 1) * cin_g].set(
                           w[g * cout_g:(g + 1) * cout_g])
    return full


def _dec_phase_weights(w_dec, groups, cin_p, cout_p):
    """ConvTranspose weight (Cin, Cout_g, 3, 3) -> per-phase stacked dense
    (n_taps, cin_p, cout_p) bf16 matrices (block-diagonal over groups)."""
    cin, cout_g = w_dec.shape[0], w_dec.shape[1]
    cin_g = cin // groups
    cout = cout_g * groups
    ws = {}
    for (ry, rx), taps in _DEC_TAPS:
        mats = []
        for dy, dx, th, tw in taps:
            m = jnp.zeros((cin, cout), w_dec.dtype)
            for g in range(groups):
                m = m.at[g * cin_g:(g + 1) * cin_g,
                         g * cout_g:(g + 1) * cout_g].set(
                             w_dec[g * cin_g:(g + 1) * cin_g, :, th, tw])
            mats.append(jnp.pad(m, ((0, cin_p - cin), (0, cout_p - cout))))
        ws[(ry, rx)] = jnp.stack(mats, axis=0).astype(jnp.bfloat16)
    return ws


def prepare_params(p, in_channels, out_channels, groups=GROUPS):
    oc = math.floor(out_channels)
    oc4 = out_channels * 4
    cin_p = _round_up(in_channels, LANE)
    coc_p = _round_up(oc, LANE)
    coc4_p = _round_up(oc4, LANE)
    cenc_p = _round_up(out_channels, LANE)

    prep = {}
    prep['w1'] = _prep_conv1x1_weight(p['w1'], cin_p, coc_p)
    prep['w2'] = _prep_conv3x3_weight(p['w2'], coc_p, coc_p)
    prep['w3'] = _prep_conv1x1_weight(p['w3'], coc_p, coc4_p)
    prep['g1'] = _pad_vec(p['g1'], coc_p); prep['b1'] = _pad_vec(p['b1'], coc_p)
    prep['g2'] = _pad_vec(p['g2'], coc_p); prep['b2'] = _pad_vec(p['b2'], coc_p)
    prep['g3'] = _pad_vec(p['g3'], coc4_p); prep['b3'] = _pad_vec(p['b3'], coc4_p)
    if p['w_sc'] is not None:
        prep['w_sc'] = _prep_conv1x1_weight(p['w_sc'], cin_p, coc4_p)
        prep['g_sc'] = _pad_vec(p['g_sc'], coc4_p)
        prep['b_sc'] = _pad_vec(p['b_sc'], coc4_p)
    else:
        prep['w_sc'] = None; prep['g_sc'] = None; prep['b_sc'] = None

    # encoder grouped 3x3 conv -> block-diagonal dense tap weight (see TODO)
    w_enc_full = _expand_grouped(p['w_enc'], groups)
    prep['w_enc'] = _prep_conv3x3_weight(w_enc_full, coc4_p, cenc_p)
    prep['g_enc'] = _pad_vec(p['g_enc'], cenc_p)
    prep['b_enc'] = _pad_vec(p['b_enc'], cenc_p)

    # decoder ConvTranspose -> per-phase tap weights
    prep['w_dec'] = _dec_phase_weights(p['w_dec'], groups, cenc_p, coc4_p)
    prep['g_dec'] = _pad_vec(p['g_dec'], coc4_p)
    prep['b_dec'] = _pad_vec(p['b_dec'], coc4_p)
    return prep


# --------------------------------------------------------------------------
# raw parameter init (PyTorch layouts) and the forward pass
# --------------------------------------------------------------------------
def init_params(key, in_channels, out_channels, stride, groups=GROUPS):
    keys = jax.random.split(key, 6)

    def conv_w(k, cout, cin, ksz):
        fan_in = cin * ksz * ksz
        return jax.random.normal(k, (cout, cin, ksz, ksz),
                                 jnp.float32) / math.sqrt(fan_in)

    oc = math.floor(out_channels)
    oc4 = out_channels * 4
    p = {}
    p['w1'] = conv_w(keys[0], oc, in_channels, 1)
    p['g1'] = jnp.ones((oc,), jnp.float32); p['b1'] = jnp.zeros((oc,), jnp.float32)
    p['w2'] = conv_w(keys[1], oc, oc, 3)
    p['g2'] = jnp.ones((oc,), jnp.float32); p['b2'] = jnp.zeros((oc,), jnp.float32)
    p['w3'] = conv_w(keys[2], oc4, oc, 1)
    p['g3'] = jnp.ones((oc4,), jnp.float32); p['b3'] = jnp.zeros((oc4,), jnp.float32)
    if in_channels != oc4 or stride != 1:
        p['w_sc'] = conv_w(keys[3], oc4, in_channels, 1)
        p['g_sc'] = jnp.ones((oc4,), jnp.float32)
        p['b_sc'] = jnp.zeros((oc4,), jnp.float32)
    else:
        p['w_sc'] = None
    # encoder: Conv2d(oc4 -> out_channels, 3x3, stride 2, pad 1, groups)
    p['w_enc'] = conv_w(keys[4], out_channels, oc4 // groups, 3)
    p['g_enc'] = jnp.ones((out_channels,), jnp.float32)
    p['b_enc'] = jnp.zeros((out_channels,), jnp.float32)
    # decoder: ConvTranspose2d(out_channels -> oc4, 3x3, s2, p1, groups);
    # PyTorch weight layout (Cin, Cout/groups, k, k)
    p['w_dec'] = jax.random.normal(
        keys[5], (out_channels, oc4 // groups, 3, 3),
        jnp.float32) / math.sqrt(max(out_channels // groups, 1) * 9)
    p['g_dec'] = jnp.ones((oc4,), jnp.float32)
    p['b_dec'] = jnp.zeros((oc4,), jnp.float32)
    return p


def bottleneck_forward(x_nchw, prep, *, in_channels, out_channels, stride,
                       layer_idx):
    N, _, H, W = x_nchw.shape
    oc4 = out_channels * 4
    cin_p = _round_up(in_channels, LANE)
    coc4_p = _round_up(oc4, LANE)
    cenc_p = _round_up(out_channels, LANE)

    x = jnp.transpose(x_nchw, (0, 2, 3, 1)).astype(jnp.bfloat16)   # NCHW->NHWC
    if cin_p != in_channels:
        x = jnp.pad(x, ((0, 0), (0, 0), (0, 0), (0, cin_p - in_channels)))

    Hs = (H - 1) // stride + 1
    Ws = (W - 1) // stride + 1
    Ms = N * Hs * Ws

    # ---- shortcut(x): 1x1 stride-s conv + BN (identity when no projection).
    # The PyTorch forward calls it twice; both calls are identical -> reuse.
    if prep['w_sc'] is not None:
        xs = x if stride == 1 else x[:, ::stride, ::stride, :]
        y, ssum, ssq = matmul_pallas(xs.reshape(Ms, cin_p), prep['w_sc'])
        s_sc, b_sc = _affine_from_stats(ssum, ssq, Ms, prep['g_sc'], prep['b_sc'])
        proj = bn_apply(y, s_sc, b_sc, relu=False)            # (Ms, coc4_p) bf16
    else:
        proj = x.reshape(Ms, coc4_p)                           # identity
    proj4 = proj.reshape(N, Hs, Ws, coc4_p)

    # ---- encoder: grouped 3x3 stride-2 conv + BN + ReLU
    y4, ssum, ssq = conv3x3_pallas(proj4, prep['w_enc'], stride=2)
    He, We = y4.shape[1], y4.shape[2]
    Me = N * He * We
    s_e, b_e = _affine_from_stats(ssum, ssq, Me, prep['g_enc'], prep['b_enc'])
    encode4 = bn_apply(y4.reshape(Me, cenc_p), s_e, b_e,
                       relu=True).reshape(N, He, We, cenc_p)

    # ---- decoder: grouped 3x3 stride-2 ConvTranspose; its BN is fused into
    # the final residual kernel (stats come from the phase matmuls).
    out_pad = 1 if layer_idx != 4 else 0
    dec4, dsum, dsq = decoder_pallas(encode4, prep['w_dec'], out_pad=out_pad)
    Md = N * dec4.shape[1] * dec4.shape[2]
    dec = dec4.reshape(Md, coc4_p)
    if dsum is None:                      # out_pad == 0: stats on cropped slab
        dsum, dsq = channel_stats(dec)
    s_d, b_d = _affine_from_stats(dsum, dsq, Md, prep['g_dec'], prep['b_dec'])

    # ---- main branch: 1x1 -> bn/relu -> 3x3(stride) -> [bn/relu fused] -> 1x1
    y, ssum, ssq = matmul_pallas(x.reshape(N * H * W, cin_p), prep['w1'])
    s1, b1 = _affine_from_stats(ssum, ssq, N * H * W, prep['g1'], prep['b1'])
    r1 = bn_apply(y, s1, b1, relu=True).reshape(N, H, W, -1)

    y4, ssum, ssq = conv3x3_pallas(r1, prep['w2'], stride=stride)
    s2, b2 = _affine_from_stats(ssum, ssq, Ms, prep['g2'], prep['b2'])

    # conv3 with bn2(+ReLU) fused into its A operand
    res, ssum, ssq = matmul_pallas(y4.reshape(Ms, -1), prep['w3'],
                                   scale=s2, shift=b2, relu=True)
    s3, b3 = _affine_from_stats(ssum, ssq, Ms, prep['g3'], prep['b3'])

    # ---- relu( bn3(res) + shortcut + bn_dec(decode) )   (single fused pass)
    out_flat = fused_residual(res, s3, b3, proj, dec, s_d, b_d)
    out = out_flat.reshape(N, Hs, Ws, coc4_p)[..., :oc4]
    return jnp.transpose(out, (0, 3, 1, 2))                   # NHWC -> NCHW


# --------------------------------------------------------------------------
# lax references for the riskiest lowerings (grouped conv / ConvTranspose)
# --------------------------------------------------------------------------
def _ref_grouped_conv(x_nhwc, w_oihw, *, stride, groups):
    xf = jnp.transpose(x_nhwc.astype(jnp.float32), (0, 3, 1, 2))
    y = jax.lax.conv_general_dilated(
        xf, w_oihw.astype(jnp.float32), window_strides=(stride, stride),
        padding=((1, 1), (1, 1)), feature_group_count=groups,
        dimension_numbers=('NCHW', 'OIHW', 'NCHW'),
        precision=jax.lax.Precision.HIGHEST)
    return jnp.transpose(y, (0, 2, 3, 1))


def _ref_grouped_convT(x_nhwc, wt, *, out_pad, groups):
    """PyTorch ConvTranspose2d(k=3, s=2, p=1, output_padding, groups) reference
    via an input-dilated conv with the flipped / channel-transposed kernel."""
    cin, cout_g = wt.shape[0], wt.shape[1]
    cin_g = cin // groups
    wf = jnp.concatenate(
        [jnp.transpose(wt[g * cin_g:(g + 1) * cin_g],
                       (1, 0, 2, 3))[:, :, ::-1, ::-1] for g in range(groups)],
        axis=0)                                          # (cout, cin_g, 3, 3)
    xf = jnp.transpose(x_nhwc.astype(jnp.float32), (0, 3, 1, 2))
    y = jax.lax.conv_general_dilated(
        xf, wf.astype(jnp.float32), window_strides=(1, 1),
        padding=((1, 1 + out_pad), (1, 1 + out_pad)), lhs_dilation=(2, 2),
        feature_group_count=groups,
        dimension_numbers=('NCHW', 'OIHW', 'NCHW'),
        precision=jax.lax.Precision.HIGHEST)
    return jnp.transpose(y, (0, 2, 3, 1))


if __name__ == "__main__":
    key = jax.random.PRNGKey(0)
    kx, kp, kv1, kv2 = jax.random.split(key, 4)

    # groups=32 requires out_channels % 32 == 0 -> smallest valid config:
    in_channels, out_channels, stride, layer_idx = 64, 32, 1, 1
    N, H, W = 2, 8, 8
    oc4 = out_channels * 4

    x = jax.random.normal(kx, (N, in_channels, H, W), jnp.float32)
    raw = init_params(kp, in_channels, out_channels, stride)
    prep = prepare_params(raw, in_channels, out_channels)    # once, outside jit

    # ---- numerical validation of the grouped encoder conv and the
    # phase-decomposed grouped ConvTranspose against lax references
    # (both sides use the same bf16-rounded weights / inputs with f32
    # accumulation, so the tolerance only absorbs the bf16 output store).
    coc4_p = _round_up(oc4, LANE)
    cenc_p = _round_up(out_channels, LANE)

    enc_x = jax.random.normal(kv1, (N, H, W, oc4), jnp.float32).astype(jnp.bfloat16)
    enc_xp = jnp.pad(enc_x, ((0, 0), (0, 0), (0, 0), (0, coc4_p - oc4)))
    got, _, _ = conv3x3_pallas(enc_xp, prep['w_enc'], stride=2)
    want = _ref_grouped_conv(enc_x, raw['w_enc'].astype(jnp.bfloat16),
                             stride=2, groups=GROUPS)
    assert float(jnp.max(jnp.abs(
        got[..., :out_channels].astype(jnp.float32) - want))) < 0.1

    dec_x = jax.random.normal(kv2, (N, H // 2, W // 2, out_channels),
                              jnp.float32).astype(jnp.bfloat16)
    dec_xp = jnp.pad(dec_x, ((0, 0), (0, 0), (0, 0),
                             (0, cenc_p - out_channels)))
    for op in (1, 0):
        got, _, _ = decoder_pallas(dec_xp, prep['w_dec'], out_pad=op)
        want = _ref_grouped_convT(dec_x, raw['w_dec'].astype(jnp.bfloat16),
                                  out_pad=op, groups=GROUPS)
        assert float(jnp.max(jnp.abs(
            got[..., :oc4].astype(jnp.float32) - want))) < 0.1

    # ---- full forward
    fwd = jax.jit(functools.partial(
        bottleneck_forward, in_channels=in_channels, out_channels=out_channels,
        stride=stride, layer_idx=layer_idx))
    y = fwd(x, prep)
    jax.block_until_ready(y)

    assert y.shape == (N, oc4, H // stride, W // stride), y.shape
    assert bool(jnp.all(y >= 0.0))      # final ReLU
    assert bool(jnp.all(jnp.isfinite(y)))
    print("KERNEL_OK")
</pallas_src>

<mosaic_0001>
module attributes {stable_mosaic.version = 11 : i64} {
  func.func @_tapconv_kernel(%arg0: i32, %arg1: i32, %arg2: memref<1x26x128xbf16, #tpu.memory_space<vmem>>, %arg3: memref<1x26x128xbf16, #tpu.memory_space<vmem>>, %arg4: memref<1x26x128xbf16, #tpu.memory_space<vmem>>, %arg5: memref<1x26x128xbf16, #tpu.memory_space<vmem>>, %arg6: memref<9x128x128xbf16, #tpu.memory_space<vmem>>, %arg7: memref<1x20x128xbf16, #tpu.memory_space<vmem>>, %arg8: memref<1x1x128xf32, #tpu.memory_space<vmem>>, %arg9: memref<1x1x128xf32, #tpu.memory_space<vmem>>) attributes {dimension_semantics = [#tpu.dimension_semantics<parallel>, #tpu.dimension_semantics<parallel>], iteration_bounds = array<i64: 2, 1>, scalar_prefetch = 0 : i64, scratch_operands = 0 : i64, tpu.core_type = #tpu.core_type<tc>, window_params = [{transform_indices = @transform_0, window_bounds = array<i64: 1, 26, 128>}, {transform_indices = @transform_1, window_bounds = array<i64: 1, 26, 128>}, {transform_indices = @transform_2, window_bounds = array<i64: 1, 26, 128>}, {transform_indices = @transform_3, window_bounds = array<i64: 1, 26, 128>}, {transform_indices = @transform_4, window_bounds = array<i64: 9, 128, 128>}, {transform_indices = @transform_5, window_bounds = array<i64: 1, 20, 128>}, {transform_indices = @transform_6, window_bounds = array<i64: 1, 1, 128>}, {transform_indices = @transform_7, window_bounds = array<i64: 1, 1, 128>}]} {
    %cst = arith.constant 0.000000e+00 : f32
    %0 = vector.broadcast %cst : f32 to vector<20x128xf32>
    %c0 = arith.constant 0 : index
    %c0_0 = arith.constant 0 : index
    %c0_1 = arith.constant 0 : index
    %1 = vector.load %arg2[%c0, %c0_0, %c0_1] : memref<1x26x128xbf16, #tpu.memory_space<vmem>>, vector<1x20x128xbf16>
    %2 = vector.shape_cast %1 : vector<1x20x128xbf16> to vector<20x128xbf16>
    %c0_2 = arith.constant 0 : index
    %c0_3 = arith.constant 0 : index
    %c0_4 = arith.constant 0 : index
    %3 = vector.load %arg6[%c0_2, %c0_3, %c0_4] : memref<9x128x128xbf16, #tpu.memory_space<vmem>>, vector<1x128x128xbf16>
    %4 = vector.shape_cast %3 : vector<1x128x128xbf16> to vector<128x128xbf16>
    %cst_5 = arith.constant dense<0.000000e+00> : vector<20x128xf32>
    %5 = tpu.matmul %2, %4, %cst_5 {dimension_numbers = #tpu.dot_dimension_numbers<[1], [0], [0], [1], [0, 0, 1, 1], [], []>} : vector<20x128xbf16>, vector<128x128xbf16>, vector<20x128xf32> -> vector<20x128xf32>
    %6 = arith.addf %0, %5 : vector<20x128xf32>
    %c0_6 = arith.constant 0 : index
    %c0_7 = arith.constant 0 : index
    %c0_8 = arith.constant 0 : index
    %7 = vector.load %arg3[%c0_6, %c0_7, %c0_8] : memref<1x26x128xbf16, #tpu.memory_space<vmem>>, vector<1x20x128xbf16>
    %8 = vector.shape_cast %7 : vector<1x20x128xbf16> to vector<20x128xbf16>
    %c1 = arith.constant 1 : index
    %c0_9 = arith.constant 0 : index
    %c0_10 = arith.constant 0 : index
    %9 = vector.load %arg6[%c1, %c0_9, %c0_10] : memref<9x128x128xbf16, #tpu.memory_space<vmem>>, vector<1x128x128xbf16>
    %10 = vector.shape_cast %9 : vector<1x128x128xbf16> to vector<128x128xbf16>
    %cst_11 = arith.constant dense<0.000000e+00> : vector<20x128xf32>
    %11 = tpu.matmul %8, %10, %cst_11 {dimension_numbers = #tpu.dot_dimension_numbers<[1], [0], [0], [1], [0, 0, 1, 1], [], []>} : vector<20x128xbf16>, vector<128x128xbf16>, vector<20x128xf32> -> vector<20x128xf32>
    %12 = arith.addf %6, %11 : vector<20x128xf32>
    %c0_12 = arith.constant 0 : index
    %c1_13 = arith.constant 1 : index
    %c0_14 = arith.constant 0 : index
    %13 = vector.load %arg2[%c0_12, %c1_13, %c0_14] : memref<1x26x128xbf16, #tpu.memory_space<vmem>>, vector<1x20x128xbf16>
    %14 = vector.shape_cast %13 : vector<1x20x128xbf16> to vector<20x128xbf16>
    %c2 = arith.constant 2 : index
    %c0_15 = arith.constant 0 : index
    %c0_16 = arith.constant 0 : index
    %15 = vector.load %arg6[%c2, %c0_15, %c0_16] : memref<9x128x128xbf16, #tpu.memory_space<vmem>>, vector<1x128x128xbf16>
    %16 = vector.shape_cast %15 : vector<1x128x128xbf16> to vector<128x128xbf16>
    %cst_17 = arith.constant dense<0.000000e+00> : vector<20x128xf32>
    %17 = tpu.matmul %14, %16, %cst_17 {dimension_numbers = #tpu.dot_dimension_numbers<[1], [0], [0], [1], [0, 0, 1, 1], [], []>} : vector<20x128xbf16>, vector<128x128xbf16>, vector<20x128xf32> -> vector<20x128xf32>
    %18 = arith.addf %12, %17 : vector<20x128xf32>
    %c0_18 = arith.constant 0 : index
    %c0_19 = arith.constant 0 : index
    %c0_20 = arith.constant 0 : index
    %19 = vector.load %arg4[%c0_18, %c0_19, %c0_20] : memref<1x26x128xbf16, #tpu.memory_space<vmem>>, vector<1x20x128xbf16>
    %20 = vector.shape_cast %19 : vector<1x20x128xbf16> to vector<20x128xbf16>
    %c3 = arith.constant 3 : index
    %c0_21 = arith.constant 0 : index
    %c0_22 = arith.constant 0 : index
    %21 = vector.load %arg6[%c3, %c0_21, %c0_22] : memref<9x128x128xbf16, #tpu.memory_space<vmem>>, vector<1x128x128xbf16>
    %22 = vector.shape_cast %21 : vector<1x128x128xbf16> to vector<128x128xbf16>
    %cst_23 = arith.constant dense<0.000000e+00> : vector<20x128xf32>
    %23 = tpu.matmul %20, %22, %cst_23 {dimension_numbers = #tpu.dot_dimension_numbers<[1], [0], [0], [1], [0, 0, 1, 1], [], []>} : vector<20x128xbf16>, vector<128x128xbf16>, vector<20x128xf32> -> vector<20x128xf32>
    %24 = arith.addf %18, %23 : vector<20x128xf32>
    %c0_24 = arith.constant 0 : index
    %c0_25 = arith.constant 0 : index
    %c0_26 = arith.constant 0 : index
    %25 = vector.load %arg5[%c0_24, %c0_25, %c0_26] : memref<1x26x128xbf16, #tpu.memory_space<vmem>>, vector<1x20x128xbf16>
    %26 = vector.shape_cast %25 : vector<1x20x128xbf16> to vector<20x128xbf16>
    %c4 = arith.constant 4 : index
    %c0_27 = arith.constant 0 : index
    %c0_28 = arith.constant 0 : index
    %27 = vector.load %arg6[%c4, %c0_27, %c0_28] : memref<9x128x128xbf16, #tpu.memory_space<vmem>>, vector<1x128x128xbf16>
    %28 = vector.shape_cast %27 : vector<1x128x128xbf16> to vector<128x128xbf16>
    %cst_29 = arith.constant dense<0.000000e+00> : vector<20x128xf32>
    %29 = tpu.matmul %26, %28, %cst_29 {dimension_numbers = #tpu.dot_dimension_numbers<[1], [0], [0], [1], [0, 0, 1, 1], [], []>} : vector<20x128xbf16>, vector<128x128xbf16>, vector<20x128xf32> -> vector<20x128xf32>
    %30 = arith.addf %24, %29 : vector<20x128xf32>
    %c0_30 = arith.constant 0 : index
    %c1_31 = arith.constant 1 : index
    %c0_32 = arith.constant 0 : index
    %31 = vector.load %arg4[%c0_30, %c1_31, %c0_32] : memref<1x26x128xbf16, #tpu.memory_space<vmem>>, vector<1x20x128xbf16>
    %32 = vector.shape_cast %31 : vector<1x20x128xbf16> to vector<20x128xbf16>
    %c5 = arith.constant 5 : index
    %c0_33 = arith.constant 0 : index
    %c0_34 = arith.constant 0 : index
    %33 = vector.load %arg6[%c5, %c0_33, %c0_34] : memref<9x128x128xbf16, #tpu.memory_space<vmem>>, vector<1x128x128xbf16>
    %34 = vector.shape_cast %33 : vector<1x128x128xbf16> to vector<128x128xbf16>
    %cst_35 = arith.constant dense<0.000000e+00> : vector<20x128xf32>
    %35 = tpu.matmul %32, %34, %cst_35 {dimension_numbers = #tpu.dot_dimension_numbers<[1], [0], [0], [1], [0, 0, 1, 1], [], []>} : vector<20x128xbf16>, vector<128x128xbf16>, vector<20x128xf32> -> vector<20x128xf32>
    %36 = arith.addf %30, %35 : vector<20x128xf32>
    %c0_36 = arith.constant 0 : index
    %c5_37 = arith.constant 5 : index
    %c0_38 = arith.constant 0 : index
    %37 = vector.load %arg2[%c0_36, %c5_37, %c0_38] : memref<1x26x128xbf16, #tpu.memory_space<vmem>>, vector<1x20x128xbf16>
    %38 = vector.shape_cast %37 : vector<1x20x128xbf16> to vector<20x128xbf16>
    %c6 = arith.constant 6 : index
    %c0_39 = arith.constant 0 : index
    %c0_40 = arith.constant 0 : index
    %39 = vector.load %arg6[%c6, %c0_39, %c0_40] : memref<9x128x128xbf16, #tpu.memory_space<vmem>>, vector<1x128x128xbf16>
    %40 = vector.shape_cast %39 : vector<1x128x128xbf16> to vector<128x128xbf16>
    %cst_41 = arith.constant dense<0.000000e+00> : vector<20x128xf32>
    %41 = tpu.matmul %38, %40, %cst_41 {dimension_numbers = #tpu.dot_dimension_numbers<[1], [0], [0], [1], [0, 0, 1, 1], [], []>} : vector<20x128xbf16>, vector<128x128xbf16>, vector<20x128xf32> -> vector<20x128xf32>
    %42 = arith.addf %36, %41 : vector<20x128xf32>
    %c0_42 = arith.constant 0 : index
    %c5_43 = arith.constant 5 : index
    %c0_44 = arith.constant 0 : index
    %43 = vector.load %arg3[%c0_42, %c5_43, %c0_44] : memref<1x26x128xbf16, #tpu.memory_space<vmem>>, vector<1x20x128xbf16>
    %44 = vector.shape_cast %43 : vector<1x20x128xbf16> to vector<20x128xbf16>
    %c7 = arith.constant 7 : index
    %c0_45 = arith.constant 0 : index
    %c0_46 = arith.constant 0 : index
    %45 = vector.load %arg6[%c7, %c0_45, %c0_46] : memref<9x128x128xbf16, #tpu.memory_space<vmem>>, vector<1x128x128xbf16>
    %46 = vector.shape_cast %45 : vector<1x128x128xbf16> to vector<128x128xbf16>
    %cst_47 = arith.constant dense<0.000000e+00> : vector<20x128xf32>
    %47 = tpu.matmul %44, %46, %cst_47 {dimension_numbers = #tpu.dot_dimension_numbers<[1], [0], [0], [1], [0, 0, 1, 1], [], []>} : vector<20x128xbf16>, vector<128x128xbf16>, vector<20x128xf32> -> vector<20x128xf32>
    %48 = arith.addf %42, %47 : vector<20x128xf32>
    %c0_48 = arith.constant 0 : index
    %c6_49 = arith.constant 6 : index
    %c0_50 = arith.constant 0 : index
    %49 = vector.load %arg2[%c0_48, %c6_49, %c0_50] : memref<1x26x128xbf16, #tpu.memory_space<vmem>>, vector<1x20x128xbf16>
    %50 = vector.shape_cast %49 : vector<1x20x128xbf16> to vector<20x128xbf16>
    %c8 = arith.constant 8 : index
    %c0_51 = arith.constant 0 : index
    %c0_52 = arith.constant 0 : index
    %51 = vector.load %arg6[%c8, %c0_51, %c0_52] : memref<9x128x128xbf16, #tpu.memory_space<vmem>>, vector<1x128x128xbf16>
    %52 = vector.shape_cast %51 : vector<1x128x128xbf16> to vector<128x128xbf16>
    %cst_53 = arith.constant dense<0.000000e+00> : vector<20x128xf32>
    %53 = tpu.matmul %50, %52, %cst_53 {dimension_numbers = #tpu.dot_dimension_numbers<[1], [0], [0], [1], [0, 0, 1, 1], [], []>} : vector<20x128xbf16>, vector<128x128xbf16>, vector<20x128xf32> -> vector<20x128xf32>
    %54 = arith.addf %48, %53 : vector<20x128xf32>
    %55 = tpu.iota {dimensions = array<i32: 0>} : vector<20x1xi32>
    %c5_i32 = arith.constant 5 : i32
    %c0_i32 = arith.constant 0 : i32
    %56 = arith.cmpi eq, %c5_i32, %c0_i32 : i32
    %c1_i32 = arith.constant 1 : i32
    %57 = arith.select %56, %c1_i32, %c5_i32 : i32
    %58 = vector.broadcast %57 : i32 to vector<20x1xi32>
    %59 = arith.remsi %55, %58 : vector<20x1xi32>
    %c0_i32_54 = arith.constant 0 : i32
    %60 = vector.broadcast %c0_i32_54 : i32 to vector<20x1xi32>
    %61 = arith.cmpi ne, %59, %60 : vector<20x1xi32>
    %c0_i32_55 = arith.constant 0 : i32
    %62 = vector.broadcast %c0_i32_55 : i32 to vector<20x1xi32>
    %63 = arith.cmpi slt, %59, %62 : vector<20x1xi32>
    %c0_i32_56 = arith.constant 0 : i32
    %64 = arith.cmpi slt, %57, %c0_i32_56 : i32
    %65 = vector.broadcast %64 : i1 to vector<20x1xi1>
    %66 = vector.broadcast %65 : vector<20x1xi1> to vector<20x1xi1>
    %67 = arith.xori %63, %66 : vector<20x1xi1>
    %68 = arith.andi %67, %61 : vector<20x1xi1>
    %69 = vector.broadcast %57 : i32 to vector<20x1xi32>
    %70 = arith.addi %59, %69 : vector<20x1xi32>
    %71 = arith.select %68, %70, %59 : vector<20x1xi1>, vector<20x1xi32>
    %c4_i32 = arith.constant 4 : i32
    %72 = vector.broadcast %c4_i32 : i32 to vector<20x1xi32>
    %73 = arith.cmpi slt, %71, %72 : vector<20x1xi32>
    %cst_57 = arith.constant 0.000000e+00 : f32
    %74 = vector.shape_cast %73 : vector<20x1xi1> to vector<20x1xi1>
    %75 = vector.broadcast %74 : vector<20x1xi1> to vector<20x128xi1>
    %76 = vector.broadcast %cst_57 : f32 to vector<20x128xf32>
    %77 = arith.select %75, %54, %76 : vector<20x128xi1>, vector<20x128xf32>
    %78 = arith.truncf %77 : vector<20x128xf32> to vector<20x128xbf16>
    %c0_58 = arith.constant 0 : index
    %c0_59 = arith.constant 0 : index
    %c0_60 = arith.constant 0 : index
    %79 = vector.load %arg7[%c0_58, %c0_59, %c0_60] : memref<1x20x128xbf16, #tpu.memory_space<vmem>>, vector<1x20x128xbf16>
    %80 = vector.shape_cast %79 : vector<1x20x128xbf16> to vector<20x128xbf16>
    %81 = vector.shape_cast %78 : vector<20x128xbf16> to vector<1x20x128xbf16>
    tpu.vector_store %arg7[%c0_58, %c0_59, %c0_60], %81 {strides = array<i32>} : memref<1x20x128xbf16, #tpu.memory_space<vmem>>, vector<1x20x128xbf16>,
    %cst_61 = arith.constant dense<0.000000e+00> : vector<128xf32>
    %82 = vector.multi_reduction <add>, %77, %cst_61 [0] : vector<20x128xf32> to vector<128xf32>
    %83 = vector.shape_cast %82 : vector<128xf32> to vector<1x128xf32>
    %84 = vector.shape_cast %83 : vector<1x128xf32> to vector<1x1x128xf32>
    %c0_62 = arith.constant 0 : index
    %c0_63 = arith.constant 0 : index
    %c0_64 = arith.constant 0 : index
    %85 = vector.load %arg8[%c0_62, %c0_63, %c0_64] : memref<1x1x128xf32, #tpu.memory_space<vmem>>, vector<1x1x128xf32>
    tpu.vector_store %arg8[%c0_62, %c0_63, %c0_64], %84 {strides = array<i32>} : memref<1x1x128xf32, #tpu.memory_space<vmem>>, vector<1x1x128xf32>,
    %86 = arith.mulf %77, %77 : vector<20x128xf32>
    %cst_65 = arith.constant dense<0.000000e+00> : vector<128xf32>
    %87 = vector.multi_reduction <add>, %86, %cst_65 [0] : vector<20x128xf32> to vector<128xf32>
    %88 = vector.shape_cast %87 : vector<128xf32> to vector<1x128xf32>
    %89 = vector.shape_cast %88 : vector<1x128xf32> to vector<1x1x128xf32>
    %c0_66 = arith.constant 0 : index
    %c0_67 = arith.constant 0 : index
    %c0_68 = arith.constant 0 : index
    %90 = vector.load %arg9[%c0_66, %c0_67, %c0_68] : memref<1x1x128xf32, #tpu.memory_space<vmem>>, vector<1x1x128xf32>
    tpu.vector_store %arg9[%c0_66, %c0_67, %c0_68], %89 {strides = array<i32>} : memref<1x1x128xf32, #tpu.memory_space<vmem>>, vector<1x1x128xf32>,
    return
  }
  func.func @transform_0(%arg0: i32, %arg1: i32) -> (i32, i32, i32) {
    %c0_i32 = arith.constant 0 : i32
    %c0_i32_0 = arith.constant 0 : i32
    %c0_i32_1 = arith.constant 0 : i32
    return %arg0, %c0_i32, %c0_i32_0 : i32, i32, i32
  }
  func.func @transform_1(%arg0: i32, %arg1: i32) -> (i32, i32, i32) {
    %c0_i32 = arith.constant 0 : i32
    %c0_i32_0 = arith.constant 0 : i32
    %c0_i32_1 = arith.constant 0 : i32
    return %arg0, %c0_i32, %c0_i32_0 : i32, i32, i32
  }
  func.func @transform_2(%arg0: i32, %arg1: i32) -> (i32, i32, i32) {
    %c0_i32 = arith.constant 0 : i32
    %c0_i32_0 = arith.constant 0 : i32
    %c0_i32_1 = arith.constant 0 : i32
    return %arg0, %c0_i32, %c0_i32_0 : i32, i32, i32
  }
  func.func @transform_3(%arg0: i32, %arg1: i32) -> (i32, i32, i32) {
    %c0_i32 = arith.constant 0 : i32
    %c0_i32_0 = arith.constant 0 : i32
    %c0_i32_1 = arith.constant 0 : i32
    return %arg0, %c0_i32, %c0_i32_0 : i32, i32, i32
  }
  func.func @transform_4(%arg0: i32, %arg1: i32) -> (i32, i32, i32) {
    %c0_i32 = arith.constant 0 : i32
    %c0_i32_0 = arith.constant 0 : i32
    %c0_i32_1 = arith.constant 0 : i32
    return %c0_i32, %c0_i32_0, %arg1 : i32, i32, i32
  }
  func.func @transform_5(%arg0: i32, %arg1: i32) -> (i32, i32, i32) {
    %c0_i32 = arith.constant 0 : i32
    %c0_i32_0 = arith.constant 0 : i32
    return %arg0, %c0_i32, %arg1 : i32, i32, i32
  }
  func.func @transform_6(%arg0: i32, %arg1: i32) -> (i32, i32, i32) {
    %c0_i32 = arith.constant 0 : i32
    %c0_i32_0 = arith.constant 0 : i32
    return %arg0, %c0_i32, %arg1 : i32, i32, i32
  }
  func.func @transform_7(%arg0: i32, %arg1: i32) -> (i32, i32, i32) {
    %c0_i32 = arith.constant 0 : i32
    %c0_i32_0 = arith.constant 0 : i32
    return %arg0, %c0_i32, %arg1 : i32, i32, i32
  }
}

</mosaic_0001>

<llo_original>
// kernel: tpu_custom_call.1
$region0: #{tpu_custom_call.1}
  #allocation0 [shape = 'u32[]', space=smem, size = 0x4, offset = 0x4, fixed_abs, tag = 'smem constant byte address 0x4 - core index']
  #allocation1 [shape = 'u32[144,128]{1,0:T(1,128)}', space=vmem, size = 0x12000, scoped, tag = 'internal scratch']
  %s0 = inlined_call_operand.vmem [shape: bf16[2,26,128], index: 0, kind: input, shape index: {}]
  %s1 = inlined_call_operand.vmem [shape: bf16[2,26,128], index: 1, kind: input, shape index: {}]
  %s2 = inlined_call_operand.vmem [shape: bf16[2,26,128], index: 2, kind: input, shape index: {}]
  %s3 = inlined_call_operand.vmem [shape: bf16[2,26,128], index: 3, kind: input, shape index: {}]
  %s4 = inlined_call_operand.hbm [shape: bf16[9,128,128], index: 4, kind: input, shape index: {}]
  %s5 = inlined_call_operand.vmem [shape: bf16[2,20,128], index: 5, kind: output, shape index: {0}]
  %s6 = inlined_call_operand.hbm [shape: f32[2,1,128], index: 6, kind: output, shape index: {1}]
  %s7 = inlined_call_operand.hbm [shape: f32[2,1,128], index: 7, kind: output, shape index: {2}]
  %8 = xla_tuple %s5, %s6, %s7
  %s9 = sld [smem:[#allocation0]]
  $region73: #{tpu_custom_call.1} parent=0
    _
  %s11 = ssub.s32 1, %s9
  %s12 = scalar_select 0, %s11, %s9
  $region1: #{tpu_custom_call.1} parent=0
    #allocation2 [shape = 'u8[294912]{0}', space=vmem, size = 0x48000, scoped, tag = 'input window, operand 4, single buffered']
    #allocation3 [shape = 's32[2]{0}', space=sflag, size = 0x8, scoped, tag = 'scoped memory for tpu_custom_call.1']
    #allocation4 [shape = 's32[2]{0}', space=sflag, size = 0x8, scoped, tag = 'scoped memory for tpu_custom_call.1']
    #allocation5 [shape = 'u8[1024]{0}', space=vmem, size = 0x400, scoped, tag = 'output window, operand 1']
    #allocation6 [shape = 'u8[1024]{0}', space=vmem, size = 0x400, scoped, tag = 'output window, operand 2']
    #allocation7 [shape = 's32[2]{0}', space=sflag, size = 0x8, scoped, tag = 'scoped memory for tpu_custom_call.1']
    %13 = vsyncpa [#allocation3], 0
    %14 = vsyncpa [#allocation4], 0
    %s15 = scalar_lea.sflag [#allocation4], 1
    %16 = vsyncpa %s15, 0
    %17 = vsyncpa [#allocation7], 0
    %s18 = scalar_lea.sflag [#allocation7], 1
    %19 = vsyncpa %s18, 0
    loop: start=0, step=1, limit=4
    $region2: #{tpu_custom_call.1} parent=1 // loop_pre_header
      _
    $region3: #{tpu_custom_call.1} parent=1 // loop_header
      %s21 = sphi 0, %s25
      %p22 = scmp.ge.s32.totalorder %s21, 4
      %s28 = sphi 0, %s40
      %s29 = sphi 0, %s36
      %s30 = sphi 0, %s28
      %s31 = sphi 0, %s29
      %s32 = sphi 0, %s30
      %s33 = sphi 0, %s31
      %s43 = sphi 0, %s45
      %s46 = sphi 0, %s43
      %s47 = sphi 0, %s46
      %s63 = sphi 0, %s47
      %s69 = sphi 0, %s71
      %s72 = sphi 0, %s69
      %s73 = sphi 0, %s72
      %s89 = sphi 0, %s73
      %s95 = sphi 0, %s97
      %s98 = sphi 0, %s95
      %s99 = sphi 0, %s98
      %s115 = sphi 0, %s99
      %s121 = sphi 0, %s123
      %s124 = sphi 0, %s121
      %s125 = sphi 0, %s124
      %s141 = sphi 0, %s125
      %s147 = sphi 0, %s149
      %s150 = sphi 0, %s147
      %s151 = sphi 0, %s150
      %s167 = sphi 0, %s151
      %s175 = sphi 0, %s177
      %s178 = sphi 0, %s175
      %s179 = sphi 0, %s178
      %s195 = sphi 0, %s179
      %s203 = sphi 0, %s205
      %s206 = sphi 0, %s203
      %s207 = sphi 0, %s206
      %s223 = sphi 0, %s207
      %s231 = sphi 0, %s233
      %s234 = sphi 0, %s231
      %s235 = sphi 0, %s234
      %s251 = sphi 0, %s235
    $region4: #{tpu_custom_call.1} parent=1 // loop_header_branch
      %24 = sbr.rel (%p22) target = $region8
    $region5: #{tpu_custom_call.1} parent=1 // loop_body
      %s26 = ssub.s32 %s21, 1
      %s27 = ssub.s32 %s21, 2
      %s34 = sadd.s32 1, %s29
      %p35 = scmp.ge.s32.totalorder %s34, 1
      %s36 = scalar_select %p35, 0, %s34
      %s37 = sadd.s32 1, %s28
      %s38 = scalar_select %p35, %s37, %s28
      %p39 = scmp.ge.s32.totalorder %s38, 2
      %s40 = scalar_select %p39, 0, %s38
      %s41 = ssub.s32 %s28, %s40
      %p42 = scmp.eq.s32.totalorder %s41, 0
      %s44 = sadd.s32 %s43, 1
      %s45 = scalar_select %p42, %s43, %s44
      %p48 = pneg %p42
      %p49 = scmp.eq.s32.totalorder %s21, 1
      %p50 = por %p48, %p49
      %p51 = scmp.ne.s32.totalorder %s43, %s46
      %p52 = scmp.eq.s32.totalorder %s21, 0
      %p53 = por %p51, %p52
      %p54 = scmp.ne.s32.totalorder %s43, %s46
      %p55 = scmp.eq.s32.totalorder %s26, 1
      %p56 = por %p54, %p55
      %p57 = scmp.ne.s32.totalorder %s46, %s47
      %p58 = scmp.eq.s32.totalorder %s26, 0
      %p59 = por %p57, %p58
      %p60 = scmp.ne.s32.totalorder %s46, %s47
      %p61 = scmp.eq.s32.totalorder %s27, 1
      %p62 = por %p60, %p61
      %p64 = scmp.ne.s32.totalorder %s47, %s63
      %p65 = scmp.eq.s32.totalorder %s27, 0
      %p66 = por %p64, %p65
      %s67 = ssub.s32 %s28, %s40
      %p68 = scmp.eq.s32.totalorder %s67, 0
      %s70 = sadd.s32 %s69, 1
      %s71 = scalar_select %p68, %s69, %s70
      %p74 = pneg %p68
      %p75 = scmp.eq.s32.totalorder %s21, 1
      %p76 = por %p74, %p75
      %p77 = scmp.ne.s32.totalorder %s69, %s72
      %p78 = scmp.eq.s32.totalorder %s21, 0
      %p79 = por %p77, %p78
      %p80 = scmp.ne.s32.totalorder %s69, %s72
      %p81 = scmp.eq.s32.totalorder %s26, 1
      %p82 = por %p80, %p81
      %p83 = scmp.ne.s32.totalorder %s72, %s73
      %p84 = scmp.eq.s32.totalorder %s26, 0
      %p85 = por %p83, %p84
      %p86 = scmp.ne.s32.totalorder %s72, %s73
      %p87 = scmp.eq.s32.totalorder %s27, 1
      %p88 = por %p86, %p87
      %p90 = scmp.ne.s32.totalorder %s73, %s89
      %p91 = scmp.eq.s32.totalorder %s27, 0
      %p92 = por %p90, %p91
      %s93 = ssub.s32 %s28, %s40
      %p94 = scmp.eq.s32.totalorder %s93, 0
      %s96 = sadd.s32 %s95, 1
      %s97 = scalar_select %p94, %s95, %s96
      %p100 = pneg %p94
      %p101 = scmp.eq.s32.totalorder %s21, 1
      %p102 = por %p100, %p101
      %p103 = scmp.ne.s32.totalorder %s95, %s98
      %p104 = scmp.eq.s32.totalorder %s21, 0
      %p105 = por %p103, %p104
      %p106 = scmp.ne.s32.totalorder %s95, %s98
      %p107 = scmp.eq.s32.totalorder %s26, 1
      %p108 = por %p106, %p107
      %p109 = scmp.ne.s32.totalorder %s98, %s99
      %p110 = scmp.eq.s32.totalorder %s26, 0
      %p111 = por %p109, %p110
      %p112 = scmp.ne.s32.totalorder %s98, %s99
      %p113 = scmp.eq.s32.totalorder %s27, 1
      %p114 = por %p112, %p113
      %p116 = scmp.ne.s32.totalorder %s99, %s115
      %p117 = scmp.eq.s32.totalorder %s27, 0
      %p118 = por %p116, %p117
      %s119 = ssub.s32 %s28, %s40
      %p120 = scmp.eq.s32.totalorder %s119, 0
      %s122 = sadd.s32 %s121, 1
      %s123 = scalar_select %p120, %s121, %s122
      %p126 = pneg %p120
      %p127 = scmp.eq.s32.totalorder %s21, 1
      %p128 = por %p126, %p127
      %p129 = scmp.ne.s32.totalorder %s121, %s124
      %p130 = scmp.eq.s32.totalorder %s21, 0
      %p131 = por %p129, %p130
      %p132 = scmp.ne.s32.totalorder %s121, %s124
      %p133 = scmp.eq.s32.totalorder %s26, 1
      %p134 = por %p132, %p133
      %p135 = scmp.ne.s32.totalorder %s124, %s125
      %p136 = scmp.eq.s32.totalorder %s26, 0
      %p137 = por %p135, %p136
      %p138 = scmp.ne.s32.totalorder %s124, %s125
      %p139 = scmp.eq.s32.totalorder %s27, 1
      %p140 = por %p138, %p139
      %p142 = scmp.ne.s32.totalorder %s125, %s141
      %p143 = scmp.eq.s32.totalorder %s27, 0
      %p144 = por %p142, %p143
      %s145 = ssub.s32 %s29, %s36
      %p146 = scmp.eq.s32.totalorder %s145, 0
      %s148 = sadd.s32 %s147, 1
      %s149 = scalar_select %p146, %s147, %s148
      %p152 = pneg %p146
      %p153 = scmp.eq.s32.totalorder %s21, 1
      %p154 = por %p152, %p153
      %p155 = scmp.ne.s32.totalorder %s147, %s150
      %p156 = scmp.eq.s32.totalorder %s21, 0
      %p157 = por %p155, %p156
      %p158 = scmp.ne.s32.totalorder %s147, %s150
      %p159 = scmp.eq.s32.totalorder %s26, 1
      %p160 = por %p158, %p159
      %p161 = scmp.ne.s32.totalorder %s150, %s151
      %p162 = scmp.eq.s32.totalorder %s26, 0
      %p163 = por %p161, %p162
      %p164 = scmp.ne.s32.totalorder %s150, %s151
      %p165 = scmp.eq.s32.totalorder %s27, 1
      %p166 = por %p164, %p165
      %p168 = scmp.ne.s32.totalorder %s151, %s167
      %p169 = scmp.eq.s32.totalorder %s27, 0
      %p170 = por %p168, %p169
      %s171 = ssub.s32 %s28, %s40
      %s172 = ssub.s32 %s29, %s36
      %s173 = sor.u32 %s171, %s172
      %p174 = scmp.eq.s32.totalorder %s173, 0
      %s176 = sadd.s32 %s175, 1
      %s177 = scalar_select %p174, %s175, %s176
      %p180 = pneg %p174
      %p181 = scmp.eq.s32.totalorder %s21, 1
      %p182 = por %p180, %p181
      %p183 = scmp.ne.s32.totalorder %s175, %s178
      %p184 = scmp.eq.s32.totalorder %s21, 0
      %p185 = por %p183, %p184
      %p186 = scmp.ne.s32.totalorder %s175, %s178
      %p187 = scmp.eq.s32.totalorder %s26, 1
      %p188 = por %p186, %p187
      %p189 = scmp.ne.s32.totalorder %s178, %s179
      %p190 = scmp.eq.s32.totalorder %s26, 0
      %p191 = por %p189, %p190
      %p192 = scmp.ne.s32.totalorder %s178, %s179
      %p193 = scmp.eq.s32.totalorder %s27, 1
      %p194 = por %p192, %p193
      %p196 = scmp.ne.s32.totalorder %s179, %s195
      %p197 = scmp.eq.s32.totalorder %s27, 0
      %p198 = por %p196, %p197
      %s199 = ssub.s32 %s28, %s40
      %s200 = ssub.s32 %s29, %s36
      %s201 = sor.u32 %s199, %s200
      %p202 = scmp.eq.s32.totalorder %s201, 0
      %s204 = sadd.s32 %s203, 1
      %s205 = scalar_select %p202, %s203, %s204
      %p208 = pneg %p202
      %p209 = scmp.eq.s32.totalorder %s21, 1
      %p210 = por %p208, %p209
      %p211 = scmp.ne.s32.totalorder %s203, %s206
      %p212 = scmp.eq.s32.totalorder %s21, 0
      %p213 = por %p211, %p212
      %p214 = scmp.ne.s32.totalorder %s203, %s206
      %p215 = scmp.eq.s32.totalorder %s26, 1
      %p216 = por %p214, %p215
      %p217 = scmp.ne.s32.totalorder %s206, %s207
      %p218 = scmp.eq.s32.totalorder %s26, 0
      %p219 = por %p217, %p218
      %p220 = scmp.ne.s32.totalorder %s206, %s207
      %p221 = scmp.eq.s32.totalorder %s27, 1
      %p222 = por %p220, %p221
      %p224 = scmp.ne.s32.totalorder %s207, %s223
      %p225 = scmp.eq.s32.totalorder %s27, 0
      %p226 = por %p224, %p225
      %s227 = ssub.s32 %s28, %s40
      %s228 = ssub.s32 %s29, %s36
      %s229 = sor.u32 %s227, %s228
      %p230 = scmp.eq.s32.totalorder %s229, 0
      %s232 = sadd.s32 %s231, 1
      %s233 = scalar_select %p230, %s231, %s232
      %p236 = pneg %p230
      %p237 = scmp.eq.s32.totalorder %s21, 1
      %p238 = por %p236, %p237
      %p239 = scmp.ne.s32.totalorder %s231, %s234
      %p240 = scmp.eq.s32.totalorder %s21, 0
      %p241 = por %p239, %p240
      %p242 = scmp.ne.s32.totalorder %s231, %s234
      %p243 = scmp.eq.s32.totalorder %s26, 1
      %p244 = por %p242, %p243
      %p245 = scmp.ne.s32.totalorder %s234, %s235
      %p246 = scmp.eq.s32.totalorder %s26, 0
      %p247 = por %p245, %p246
      %p248 = scmp.ne.s32.totalorder %s234, %s235
      %p249 = scmp.eq.s32.totalorder %s27, 1
      %p250 = por %p248, %p249
      %p252 = scmp.ne.s32.totalorder %s235, %s251
      %p253 = scmp.eq.s32.totalorder %s27, 0
      %p254 = por %p252, %p253
      %p255 = scmp.le.s32.totalorder 1, %s21
      %p256 = scmp.lt.s32.totalorder %s21, 3
      %p257 = pnand %p255, %p256
      %p258 = pneg %p257
      // Predicated region
      $region9: #{tpu_custom_call.1} parent=5 // pred_check
        _
      $region10: #{tpu_custom_call.1} parent=5 // pred_check_branch
        %260 = sbr.rel (%p257) target = $region12
      $region11: #{tpu_custom_call.1} parent=5 // pred_region
        %s261 = ssub.s32 %s21, 1
        // Predicated region
        $region13: #{tpu_custom_call.1} parent=11 // pred_check
          %p262 = pneg %p163
        $region14: #{tpu_custom_call.1} parent=11 // pred_check_branch
          %264 = sbr.rel (%p262) target = $region16
        $region15: #{tpu_custom_call.1} parent=11 // pred_region
          %s266 = ssub.s32 9216, 9216
          %267 = vsyncadd [#allocation3], %s266
          %s268 = smul.addr %s31, 64
          %s269 = scalar_lea.hbm %s4, %s268
          %s270 = sshll.u32 [#allocation2], 4
          %s271 = int_to_ptr.vmem [resolvable:$true] %s270
          %276 = dma.hbm_to_vmem [thread:$0]  %s269, 9216, %s271, [#allocation3], 64, 64, 4
        $region16: #{tpu_custom_call.1} parent=11 // pred_fallthru
          _
      $region12: #{tpu_custom_call.1} parent=5 // pred_fallthru
        _
      %p277 = scmp.lt.s32.totalorder %s21, 2
      // Predicated region
      $region17: #{tpu_custom_call.1} parent=5 // pred_check
        %p278 = pneg %p277
      $region18: #{tpu_custom_call.1} parent=5 // pred_check_branch
        %280 = sbr.rel (%p278) target = $region20
      $region19: #{tpu_custom_call.1} parent=5 // pred_region
        // Predicated region
        $region21: #{tpu_custom_call.1} parent=19 // pred_check
          %p281 = pneg %p53
        $region22: #{tpu_custom_call.1} parent=19 // pred_check_branch
          %283 = sbr.rel (%p281) target = $region24
        $region23: #{tpu_custom_call.1} parent=19 // pred_region
          %p284 = scmp.lt.s32.totalorder %s28, 1
          %s285 = scalar_select %p284, %s28, 1
          %s286 = smul.addr %s285, 4
          %s287 = smul.addr %s286, 4
          %s288 = scalar_lea.vmem %s0, %s287
        $region24: #{tpu_custom_call.1} parent=19 // pred_fallthru
          _
        // Predicated region
        $region25: #{tpu_custom_call.1} parent=19 // pred_check
          %p289 = pneg %p79
        $region26: #{tpu_custom_call.1} parent=19 // pred_check_branch
          %291 = sbr.rel (%p289) target = $region28
        $region27: #{tpu_custom_call.1} parent=19 // pred_region
          %p292 = scmp.lt.s32.totalorder %s28, 1
          %s293 = scalar_select %p292, %s28, 1
          %s294 = smul.addr %s293, 4
          %s295 = smul.addr %s294, 4
          %s296 = scalar_lea.vmem %s1, %s295
        $region28: #{tpu_custom_call.1} parent=19 // pred_fallthru
          _
        // Predicated region
        $region29: #{tpu_custom_call.1} parent=19 // pred_check
          %p297 = pneg %p105
        $region30: #{tpu_custom_call.1} parent=19 // pred_check_branch
          %299 = sbr.rel (%p297) target = $region32
        $region31: #{tpu_custom_call.1} parent=19 // pred_region
          %p300 = scmp.lt.s32.totalorder %s28, 1
          %s301 = scalar_select %p300, %s28, 1
          %s302 = smul.addr %s301, 4
          %s303 = smul.addr %s302, 4
          %s304 = scalar_lea.vmem %s2, %s303
        $region32: #{tpu_custom_call.1} parent=19 // pred_fallthru
          _
        // Predicated region
        $region33: #{tpu_custom_call.1} parent=19 // pred_check
          %p305 = pneg %p131
        $region34: #{tpu_custom_call.1} parent=19 // pred_check_branch
          %307 = sbr.rel (%p305) target = $region36
        $region35: #{tpu_custom_call.1} parent=19 // pred_region
          %p308 = scmp.lt.s32.totalorder %s28, 1
          %s309 = scalar_select %p308, %s28, 1
          %s310 = smul.addr %s309, 4
          %s311 = smul.addr %s310, 4
          %s312 = scalar_lea.vmem %s3, %s311
        $region36: #{tpu_custom_call.1} parent=19 // pred_fallthru
          _
      $region20: #{tpu_custom_call.1} parent=5 // pred_fallthru
        _
      %p313 = scmp.le.s32.totalorder 1, %s21
      %p314 = scmp.lt.s32.totalorder %s21, 3
      %p315 = pnand %p313, %p314
      %p316 = pneg %p315
      // Predicated region
      $region37: #{tpu_custom_call.1} parent=5 // pred_check
        _
      $region38: #{tpu_custom_call.1} parent=5 // pred_check_branch
        %318 = sbr.rel (%p315) target = $region40
      $region39: #{tpu_custom_call.1} parent=5 // pred_region
        %s319 = ssub.s32 %s21, 1
        // Predicated region
        $region41: #{tpu_custom_call.1} parent=39 // pred_check
          %p320 = pneg %p163
        $region42: #{tpu_custom_call.1} parent=39 // pred_check_branch
          %322 = sbr.rel (%p320) target = $region44
        $region43: #{tpu_custom_call.1} parent=39 // pred_region
          %323 = dma.done [#allocation3], 9216
        $region44: #{tpu_custom_call.1} parent=39 // pred_fallthru
          _
        %p324 = scmp.lt.s32.totalorder %s30, 1
        %s325 = scalar_select %p324, %s30, 1
        %s326 = smul.addr %s325, 4
        %s327 = smul.addr %s326, 4
        %s328 = scalar_lea.vmem %s0, %s327
        %p329 = pneg %p59
        %p330 = pneg %p56
        %p331 = scmp.lt.s32.totalorder %s30, 1
        %s332 = scalar_select %p331, %s30, 1
        %s333 = smul.addr %s332, 4
        %s334 = smul.addr %s333, 4
        %s335 = scalar_lea.vmem %s1, %s334
        %p336 = pneg %p85
        %p337 = pneg %p82
        %p338 = scmp.lt.s32.totalorder %s30, 1
        %s339 = scalar_select %p338, %s30, 1
        %s340 = smul.addr %s339, 4
        %s341 = smul.addr %s340, 4
        %s342 = scalar_lea.vmem %s2, %s341
        %p343 = pneg %p111
        %p344 = pneg %p108
        %p345 = scmp.lt.s32.totalorder %s30, 1
        %s346 = scalar_select %p345, %s30, 1
        %s347 = smul.addr %s346, 4
        %s348 = smul.addr %s347, 4
        %s349 = scalar_lea.vmem %s3, %s348
        %p350 = pneg %p137
        %p351 = pneg %p134
        %p352 = pneg %p163
        %p353 = pneg %p160
        %p354 = pneg %p191
        %p355 = pneg %p188
        %p356 = scmp.lt.s32.totalorder %s30, 1
        %s357 = scalar_select %p356, %s30, 1
        %p358 = scmp.lt.s32.totalorder %s31, 0
        %s359 = scalar_select %p358, %s31, 0
        %s360 = smul.addr %s357, 3
        %s361 = sadd.s32 %s359, %s360
        %s362 = smul.addr %s361, 4
        %s363 = scalar_lea.vmem %s5, %s362
        %p364 = pneg %p219
        %p365 = pneg %p216
        %s366 = sand.u32 %s206, 1
        %s367 = scalar_lea.sflag [#allocation4], %s366
        %s368 = sand.u32 %s206, 1
        %s369 = scalar_lea.vmem [#allocation5], %s368
        %p370 = pneg %p247
        %p371 = pneg %p244
        %s372 = sand.u32 %s234, 1
        %s373 = scalar_lea.sflag [#allocation7], %s372
        %s374 = sand.u32 %s234, 1
        %s375 = scalar_lea.vmem [#allocation6], %s374
        %p376 = scmp.lt.s32.totalorder %s30, 1
        %s377 = scalar_select %p376, %s30, 1
        %s378 = smul.addr %s377, 4
        %s379 = smul.addr %s378, 4
        %s380 = scalar_lea.vmem %s0, %s379
        %p381 = scmp.lt.s32.totalorder %s30, 1
        %s382 = scalar_select %p381, %s30, 1
        %s383 = smul.addr %s382, 4
        %s384 = smul.addr %s383, 4
        %s385 = scalar_lea.vmem %s1, %s384
        %p386 = scmp.lt.s32.totalorder %s30, 1
        %s387 = scalar_select %p386, %s30, 1
        %s388 = smul.addr %s387, 4
        %s389 = smul.addr %s388, 4
        %s390 = scalar_lea.vmem %s2, %s389
        %p391 = scmp.lt.s32.totalorder %s30, 1
        %s392 = scalar_select %p391, %s30, 1
        %s393 = smul.addr %s392, 4
        %s394 = smul.addr %s393, 4
        %s395 = scalar_lea.vmem %s3, %s394
        %p396 = scmp.lt.s32.totalorder %s30, 1
        %s397 = scalar_select %p396, %s30, 1
        %p398 = scmp.lt.s32.totalorder %s31, 0
        %s399 = scalar_select %p398, %s31, 0
        %s400 = smul.addr %s397, 3
        %s401 = sadd.s32 %s399, %s400
        %s402 = smul.addr %s401, 4
        %s403 = scalar_lea.vmem %s5, %s402
        %v405 = vld [vmem:[%s380] sm:$0xf]
        %v406 = vld [vmem:[%s380 + $0x4] sm:$0xf]
        %v407 = vld [vmem:[%s380 + $0x8] sm:$0x3]
        %v408 = vld [vmem:[#allocation2] sm:$0xf]
        %v409 = vld [vmem:[#allocation2 + $0x4] sm:$0xf]
        %v410 = vld [vmem:[#allocation2 + $0x8] sm:$0xf]
        %v411 = vld [vmem:[#allocation2 + $0xc] sm:$0xf]
        %v412 = vld [vmem:[#allocation2 + $0x10] sm:$0xf]
        %v413 = vld [vmem:[#allocation2 + $0x14] sm:$0xf]
        %v414 = vld [vmem:[#allocation2 + $0x18] sm:$0xf]
        %v415 = vld [vmem:[#allocation2 + $0x1c] sm:$0xf]
        %v416 = vld [vmem:[#allocation2 + $0x20] sm:$0xf]
        %v417 = vld [vmem:[#allocation2 + $0x24] sm:$0xf]
        %v418 = vld [vmem:[#allocation2 + $0x28] sm:$0xf]
        %v419 = vld [vmem:[#allocation2 + $0x2c] sm:$0xf]
        %v420 = vld [vmem:[#allocation2 + $0x30] sm:$0xf]
        %v421 = vld [vmem:[#allocation2 + $0x34] sm:$0xf]
        %v422 = vld [vmem:[#allocation2 + $0x38] sm:$0xf]
        %v423 = vld [vmem:[#allocation2 + $0x3c] sm:$0xf]
        %v424 = vld [vmem:[%s385] sm:$0xf]
        %v425 = vld [vmem:[%s385 + $0x4] sm:$0xf]
        %v426 = vld [vmem:[%s385 + $0x8] sm:$0x3]
        %s427 = scalar_lea.vmem [#allocation2], 64
        %v428 = vld [vmem:[%s427] sm:$0xf]
        %v429 = vld [vmem:[%s427 + $0x4] sm:$0xf]
        %v430 = vld [vmem:[%s427 + $0x8] sm:$0xf]
        %v431 = vld [vmem:[%s427 + $0xc] sm:$0xf]
        %v432 = vld [vmem:[%s427 + $0x10] sm:$0xf]
        %v433 = vld [vmem:[%s427 + $0x14] sm:$0xf]
        %v434 = vld [vmem:[%s427 + $0x18] sm:$0xf]
        %v435 = vld [vmem:[%s427 + $0x1c] sm:$0xf]
        %v436 = vld [vmem:[%s427 + $0x20] sm:$0xf]
        %v437 = vld [vmem:[%s427 + $0x24] sm:$0xf]
        %v438 = vld [vmem:[%s427 + $0x28] sm:$0xf]
        %v439 = vld [vmem:[%s427 + $0x2c] sm:$0xf]
        %v440 = vld [vmem:[%s427 + $0x30] sm:$0xf]
        %v441 = vld [vmem:[%s427 + $0x34] sm:$0xf]
        %v442 = vld [vmem:[%s427 + $0x38] sm:$0xf]
        %v443 = vld [vmem:[%s427 + $0x3c] sm:$0xf]
        %v447 = vunpack.c.l.b16 %v424
        %v448 = vunpack.c.l.b16 %v425
        %v449 = vunpack.c.l.b16 %v426
        %v450 = vpack.c.b16 %v448, %v447
        %v451 = vpack.c.b16 %v449, %v449
        %v470 = vunpack.c.l.b16 %v428
        %v471 = vunpack.c.l.b16 %v429
        %v472 = vunpack.c.l.b16 %v430
        %v473 = vunpack.c.l.b16 %v431
        %v474 = vunpack.c.l.b16 %v432
        %v475 = vunpack.c.l.b16 %v433
        %v476 = vunpack.c.l.b16 %v434
        %v477 = vunpack.c.l.b16 %v435
        %v478 = vunpack.c.l.b16 %v436
        %v479 = vunpack.c.l.b16 %v437
        %v480 = vunpack.c.l.b16 %v438
        %v481 = vunpack.c.l.b16 %v439
        %v482 = vunpack.c.l.b16 %v440
        %v483 = vunpack.c.l.b16 %v441
        %v484 = vunpack.c.l.b16 %v442
        %v485 = vunpack.c.l.b16 %v443
        %v486 = vpack.c.b16 %v471, %v470
        %v487 = vpack.c.b16 %v473, %v472
        %v488 = vpack.c.b16 %v475, %v474
        %v489 = vpack.c.b16 %v477, %v476
        %v490 = vpack.c.b16 %v479, %v478
        %v491 = vpack.c.b16 %v481, %v480
        %v492 = vpack.c.b16 %v483, %v482
        %v493 = vpack.c.b16 %v485, %v484
        %502 = vmatprep.subr.bf16.mxu0 0
        %503 = vmatpush1.bf16.msra.mxu0 %v493
        %504 = vmatprep.subr.bf16.mxu0 0
        %505 = vmatpush1.bf16.msra.mxu0 %v492
        %506 = vmatprep.subr.bf16.mxu0 0
        %507 = vmatpush1.bf16.msra.mxu0 %v491
        %508 = vmatprep.subr.bf16.mxu0 0
        %509 = vmatpush1.bf16.msra.mxu0 %v490
        %510 = vmatprep.subr.bf16.mxu0 0
        %511 = vmatpush1.bf16.msra.mxu0 %v489
        %512 = vmatprep.subr.bf16.mxu0 0
        %513 = vmatpush1.bf16.msra.mxu0 %v488
        %514 = vmatprep.subr.bf16.mxu0 0
        %515 = vmatpush1.bf16.msra.mxu0 %v487
        %516 = vmatprep.subr.bf16.mxu0 0
        %517 = vmatpush1.bf16.msra.mxu0 %v486
        %518 = vmatprep.subr.bf16.mxu0 0
        %519 = vmatpush2.bf16.msra.mxu0 0
        %520 = vmatprep.subr.bf16.mxu0 0
        %521 = vmatpush2.bf16.msra.mxu0 0
        %522 = vmatprep.subr.bf16.mxu0 0
        %523 = vmatpush2.bf16.msra.mxu0 0
        %524 = vmatprep.subr.bf16.mxu0 0
        %525 = vmatpush2.bf16.msra.mxu0 0
        %526 = vmatprep.subr.bf16.mxu0 0
        %527 = vmatpush2.bf16.msra.mxu0 0
        %528 = vmatprep.subr.bf16.mxu0 0
        %529 = vmatpush2.bf16.msra.mxu0 0
        %530 = vmatprep.subr.bf16.mxu0 0
        %531 = vmatpush2.bf16.msra.mxu0 0
        %532 = vmatprep.subr.bf16.mxu0 0
        %533 = vmatpush2.bf16.msra.mxu0 0
        %534 = vmatprep.mubr.bf16.mxu0 0
        %535 = vmatmul.mubr.bf16.gmra.mxu0 %v450
        %v536 = vpop.f32.mrf.mxu0
        %v537 = vadd.f32 0.0, %v536
        %v538 = vpop.f32.mrf.mxu0
        %v539 = vpop.f32.mrf.mxu0
        %v540 = vadd.f32 0.0, %v539
        %v541 = vpop.f32.mrf.mxu0
        %542 = vmatprep.mubr.bf16.mxu0 0
        %543 = vmatmul.mubr.bf16.gmra.mxu0 %v451
        %v544 = vpop.f32.mrf.mxu0
        %v545 = vadd.f32 0.0, %v544
        %v546 = vpop.f32.mrf.mxu0
        %v547 = vpop.f32.mrf.mxu0
        %v548 = vpop.f32.mrf.mxu0
        %549 = vdwg.mxu0
        %v553 = vunpack.c.l.b16 %v405
        %v554 = vunpack.c.l.b16 %v406
        %v555 = vunpack.c.l.b16 %v407
        %v556 = vpack.c.b16 %v554, %v553
        %v557 = vpack.c.b16 %v555, %v555
        %v576 = vunpack.c.l.b16 %v408
        %v577 = vunpack.c.l.b16 %v409
        %v578 = vunpack.c.l.b16 %v410
        %v579 = vunpack.c.l.b16 %v411
        %v580 = vunpack.c.l.b16 %v412
        %v581 = vunpack.c.l.b16 %v413
        %v582 = vunpack.c.l.b16 %v414
        %v583 = vunpack.c.l.b16 %v415
        %v584 = vunpack.c.l.b16 %v416
        %v585 = vunpack.c.l.b16 %v417
        %v586 = vunpack.c.l.b16 %v418
        %v587 = vunpack.c.l.b16 %v419
        %v588 = vunpack.c.l.b16 %v420
        %v589 = vunpack.c.l.b16 %v421
        %v590 = vunpack.c.l.b16 %v422
        %v591 = vunpack.c.l.b16 %v423
        %v592 = vpack.c.b16 %v577, %v576
        %v593 = vpack.c.b16 %v579, %v578
        %v594 = vpack.c.b16 %v581, %v580
        %v595 = vpack.c.b16 %v583, %v582
        %v596 = vpack.c.b16 %v585, %v584
        %v597 = vpack.c.b16 %v587, %v586
        %v598 = vpack.c.b16 %v589, %v588
        %v599 = vpack.c.b16 %v591, %v590
        %608 = vmatprep.subr.bf16.mxu0 0
        %609 = vmatpush1.bf16.msra.mxu0 %v599
        %610 = vmatprep.subr.bf16.mxu0 0
        %611 = vmatpush1.bf16.msra.mxu0 %v598
        %612 = vmatprep.subr.bf16.mxu0 0
        %613 = vmatpush1.bf16.msra.mxu0 %v597
        %614 = vmatprep.subr.bf16.mxu0 0
        %615 = vmatpush1.bf16.msra.mxu0 %v596
        %616 = vmatprep.subr.bf16.mxu0 0
        %617 = vmatpush1.bf16.msra.mxu0 %v595
        %618 = vmatprep.subr.bf16.mxu0 0
        %619 = vmatpush1.bf16.msra.mxu0 %v594
        %620 = vmatprep.subr.bf16.mxu0 0
        %621 = vmatpush1.bf16.msra.mxu0 %v593
        %622 = vmatprep.subr.bf16.mxu0 0
        %623 = vmatpush1.bf16.msra.mxu0 %v592
        %624 = vmatprep.subr.bf16.mxu0 0
        %625 = vmatpush2.bf16.msra.mxu0 0
        %626 = vmatprep.subr.bf16.mxu0 0
        %627 = vmatpush2.bf16.msra.mxu0 0
        %628 = vmatprep.subr.bf16.mxu0 0
        %629 = vmatpush2.bf16.msra.mxu0 0
        %630 = vmatprep.subr.bf16.mxu0 0
        %631 = vmatpush2.bf16.msra.mxu0 0
        %632 = vmatprep.subr.bf16.mxu0 0
        %633 = vmatpush2.bf16.msra.mxu0 0
        %634 = vmatprep.subr.bf16.mxu0 0
        %635 = vmatpush2.bf16.msra.mxu0 0
        %636 = vmatprep.subr.bf16.mxu0 0
        %637 = vmatpush2.bf16.msra.mxu0 0
        %638 = vmatprep.subr.bf16.mxu0 0
        %639 = vmatpush2.bf16.msra.mxu0 0
        %640 = vmatprep.mubr.bf16.mxu0 0
        %641 = vmatmul.mubr.bf16.gmra.mxu0 %v556
        %v642 = vpop.f32.mrf.mxu0
        %v643 = vadd.f32 %v537, %v642
        %v644 = vpop.f32.mrf.mxu0
        %v645 = vpop.f32.mrf.mxu0
        %v646 = vadd.f32 %v540, %v645
        %v647 = vpop.f32.mrf.mxu0
        %648 = vmatprep.mubr.bf16.mxu0 0
        %649 = vmatmul.mubr.bf16.gmra.mxu0 %v557
        %v650 = vpop.f32.mrf.mxu0
        %v651 = vadd.f32 %v545, %v650
        %v652 = vpop.f32.mrf.mxu0
        %v653 = vpop.f32.mrf.mxu0
        %v654 = vpop.f32.mrf.mxu0
        %655 = vdwg.mxu0
        %v656 = vld [vmem:[%s380 + $0x8] sm:$0x7]
        %s657 = scalar_lea.vmem [#allocation2], 128
        %v658 = vld [vmem:[%s657] sm:$0xf]
        %v659 = vld [vmem:[%s657 + $0x4] sm:$0xf]
        %v660 = vld [vmem:[%s657 + $0x8] sm:$0xf]
        %v661 = vld [vmem:[%s657 + $0xc] sm:$0xf]
        %v662 = vld [vmem:[%s657 + $0x10] sm:$0xf]
        %v663 = vld [vmem:[%s657 + $0x14] sm:$0xf]
        %v664 = vld [vmem:[%s657 + $0x18] sm:$0xf]
        %v665 = vld [vmem:[%s657 + $0x1c] sm:$0xf]
        %v666 = vld [vmem:[%s657 + $0x20] sm:$0xf]
        %v667 = vld [vmem:[%s657 + $0x24] sm:$0xf]
        %v668 = vld [vmem:[%s657 + $0x28] sm:$0xf]
        %v669 = vld [vmem:[%s657 + $0x2c] sm:$0xf]
        %v670 = vld [vmem:[%s657 + $0x30] sm:$0xf]
        %v671 = vld [vmem:[%s657 + $0x34] sm:$0xf]
        %v672 = vld [vmem:[%s657 + $0x38] sm:$0xf]
        %v673 = vld [vmem:[%s657 + $0x3c] sm:$0xf]
        %v675 = vunpack.c.l.b16 %v656
        %v676 = vpack.c.b16 %v675, %v675
        %vm677 = vsmask.f32 7424
        %v679 = vshrl.u32 %v556, 16
        %v681 = vshll.u32 %v556, 16
        %v683 = vrot.slane %v681, 1
        %v684 = vor.u32 %v679, %v683
        %v686 = vshll.u32 %v676, 16
        %v688 = vrot.slane %v686, 1
        %v689 = vsel %vm677, %v684, %v688
        %v690 = vshrl.u32 %v676, 16
        %v692 = vor.u32 %v690, %v688
        %v711 = vunpack.c.l.b16 %v658
        %v712 = vunpack.c.l.b16 %v659
        %v713 = vunpack.c.l.b16 %v660
        %v714 = vunpack.c.l.b16 %v661
        %v715 = vunpack.c.l.b16 %v662
        %v716 = vunpack.c.l.b16 %v663
        %v717 = vunpack.c.l.b16 %v664
        %v718 = vunpack.c.l.b16 %v665
        %v719 = vunpack.c.l.b16 %v666
        %v720 = vunpack.c.l.b16 %v667
        %v721 = vunpack.c.l.b16 %v668
        %v722 = vunpack.c.l.b16 %v669
        %v723 = vunpack.c.l.b16 %v670
        %v724 = vunpack.c.l.b16 %v671
        %v725 = vunpack.c.l.b16 %v672
        %v726 = vunpack.c.l.b16 %v673
        %v727 = vpack.c.b16 %v712, %v711
        %v728 = vpack.c.b16 %v714, %v713
        %v729 = vpack.c.b16 %v716, %v715
        %v730 = vpack.c.b16 %v718, %v717
        %v731 = vpack.c.b16 %v720, %v719
        %v732 = vpack.c.b16 %v722, %v721
        %v733 = vpack.c.b16 %v724, %v723
        %v734 = vpack.c.b16 %v726, %v725
        %743 = vmatprep.subr.bf16.mxu0 0
        %744 = vmatpush1.bf16.msra.mxu0 %v734
        %745 = vmatprep.subr.bf16.mxu0 0
        %746 = vmatpush1.bf16.msra.mxu0 %v733
        %747 = vmatprep.subr.bf16.mxu0 0
        %748 = vmatpush1.bf16.msra.mxu0 %v732
        %749 = vmatprep.subr.bf16.mxu0 0
        %750 = vmatpush1.bf16.msra.mxu0 %v731
        %751 = vmatprep.subr.bf16.mxu0 0
        %752 = vmatpush1.bf16.msra.mxu0 %v730
        %753 = vmatprep.subr.bf16.mxu0 0
        %754 = vmatpush1.bf16.msra.mxu0 %v729
        %755 = vmatprep.subr.bf16.mxu0 0
        %756 = vmatpush1.bf16.msra.mxu0 %v728
        %757 = vmatprep.subr.bf16.mxu0 0
        %758 = vmatpush1.bf16.msra.mxu0 %v727
        %759 = vmatprep.subr.bf16.mxu0 0
        %760 = vmatpush2.bf16.msra.mxu0 0
        %761 = vmatprep.subr.bf16.mxu0 0
        %762 = vmatpush2.bf16.msra.mxu0 0
        %763 = vmatprep.subr.bf16.mxu0 0
        %764 = vmatpush2.bf16.msra.mxu0 0
        %765 = vmatprep.subr.bf16.mxu0 0
        %766 = vmatpush2.bf16.msra.mxu0 0
        %767 = vmatprep.subr.bf16.mxu0 0
        %768 = vmatpush2.bf16.msra.mxu0 0
        %769 = vmatprep.subr.bf16.mxu0 0
        %770 = vmatpush2.bf16.msra.mxu0 0
        %771 = vmatprep.subr.bf16.mxu0 0
        %772 = vmatpush2.bf16.msra.mxu0 0
        %773 = vmatprep.subr.bf16.mxu0 0
        %774 = vmatpush2.bf16.msra.mxu0 0
        %775 = vmatprep.mubr.bf16.mxu0 0
        %776 = vmatmul.mubr.bf16.gmra.mxu0 %v689
        %v777 = vpop.f32.mrf.mxu0
        %v778 = vadd.f32 0.0, %v777
        %v779 = vpop.f32.mrf.mxu0
        %v780 = vpop.f32.mrf.mxu0
        %v781 = vadd.f32 0.0, %v780
        %v782 = vpop.f32.mrf.mxu0
        %783 = vmatprep.mubr.bf16.mxu0 0
        %784 = vmatmul.mubr.bf16.gmra.mxu0 %v692
        %v785 = vpop.f32.mrf.mxu0
        %v786 = vadd.f32 0.0, %v785
        %v787 = vpop.f32.mrf.mxu0
        %v788 = vpop.f32.mrf.mxu0
        %v789 = vpop.f32.mrf.mxu0
        %790 = vdwg.mxu0
        %v791 = vadd.f32 %v643, %v778
        %v792 = vadd.f32 %v646, %v781
        %v793 = vadd.f32 %v651, %v786
        %v794 = vld [vmem:[%s390] sm:$0xf]
        %v795 = vld [vmem:[%s390 + $0x4] sm:$0xf]
        %v796 = vld [vmem:[%s390 + $0x8] sm:$0x3]
        %s797 = scalar_lea.vmem [#allocation2], 192
        %v798 = vld [vmem:[%s797] sm:$0xf]
        %v799 = vld [vmem:[%s797 + $0x4] sm:$0xf]
        %v800 = vld [vmem:[%s797 + $0x8] sm:$0xf]
        %v801 = vld [vmem:[%s797 + $0xc] sm:$0xf]
        %v802 = vld [vmem:[%s797 + $0x10] sm:$0xf]
        %v803 = vld [vmem:[%s797 + $0x14] sm:$0xf]
        %v804 = vld [vmem:[%s797 + $0x18] sm:$0xf]
        %v805 = vld [vmem:[%s797 + $0x1c] sm:$0xf]
        %v806 = vld [vmem:[%s797 + $0x20] sm:$0xf]
        %v807 = vld [vmem:[%s797 + $0x24] sm:$0xf]
        %v808 = vld [vmem:[%s797 + $0x28] sm:$0xf]
        %v809 = vld [vmem:[%s797 + $0x2c] sm:$0xf]
        %v810 = vld [vmem:[%s797 + $0x30] sm:$0xf]
        %v811 = vld [vmem:[%s797 + $0x34] sm:$0xf]
        %v812 = vld [vmem:[%s797 + $0x38] sm:$0xf]
        %v813 = vld [vmem:[%s797 + $0x3c] sm:$0xf]
        %v817 = vunpack.c.l.b16 %v794
        %v818 = vunpack.c.l.b16 %v795
        %v819 = vunpack.c.l.b16 %v796
        %v820 = vpack.c.b16 %v818, %v817
        %v821 = vpack.c.b16 %v819, %v819
        %v840 = vunpack.c.l.b16 %v798
        %v841 = vunpack.c.l.b16 %v799
        %v842 = vunpack.c.l.b16 %v800
        %v843 = vunpack.c.l.b16 %v801
        %v844 = vunpack.c.l.b16 %v802
        %v845 = vunpack.c.l.b16 %v803
        %v846 = vunpack.c.l.b16 %v804
        %v847 = vunpack.c.l.b16 %v805
        %v848 = vunpack.c.l.b16 %v806
        %v849 = vunpack.c.l.b16 %v807
        %v850 = vunpack.c.l.b16 %v808
        %v851 = vunpack.c.l.b16 %v809
        %v852 = vunpack.c.l.b16 %v810
        %v853 = vunpack.c.l.b16 %v811
        %v854 = vunpack.c.l.b16 %v812
        %v855 = vunpack.c.l.b16 %v813
        %v856 = vpack.c.b16 %v841, %v840
        %v857 = vpack.c.b16 %v843, %v842
        %v858 = vpack.c.b16 %v845, %v844
        %v859 = vpack.c.b16 %v847, %v846
        %v860 = vpack.c.b16 %v849, %v848
        %v861 = vpack.c.b16 %v851, %v850
        %v862 = vpack.c.b16 %v853, %v852
        %v863 = vpack.c.b16 %v855, %v854
        %872 = vmatprep.subr.bf16.mxu0 0
        %873 = vmatpush1.bf16.msra.mxu0 %v863
        %874 = vmatprep.subr.bf16.mxu0 0
        %875 = vmatpush1.bf16.msra.mxu0 %v862
        %876 = vmatprep.subr.bf16.mxu0 0
        %877 = vmatpush1.bf16.msra.mxu0 %v861
        %878 = vmatprep.subr.bf16.mxu0 0
        %879 = vmatpush1.bf16.msra.mxu0 %v860
        %880 = vmatprep.subr.bf16.mxu0 0
        %881 = vmatpush1.bf16.msra.mxu0 %v859
        %882 = vmatprep.subr.bf16.mxu0 0
        %883 = vmatpush1.bf16.msra.mxu0 %v858
        %884 = vmatprep.subr.bf16.mxu0 0
        %885 = vmatpush1.bf16.msra.mxu0 %v857
        %886 = vmatprep.subr.bf16.mxu0 0
        %887 = vmatpush1.bf16.msra.mxu0 %v856
        %888 = vmatprep.subr.bf16.mxu0 0
        %889 = vmatpush2.bf16.msra.mxu0 0
        %890 = vmatprep.subr.bf16.mxu0 0
        %891 = vmatpush2.bf16.msra.mxu0 0
        %892 = vmatprep.subr.bf16.mxu0 0
        %893 = vmatpush2.bf16.msra.mxu0 0
        %894 = vmatprep.subr.bf16.mxu0 0
        %895 = vmatpush2.bf16.msra.mxu0 0
        %896 = vmatprep.subr.bf16.mxu0 0
        %897 = vmatpush2.bf16.msra.mxu0 0
        %898 = vmatprep.subr.bf16.mxu0 0
        %899 = vmatpush2.bf16.msra.mxu0 0
        %900 = vmatprep.subr.bf16.mxu0 0
        %901 = vmatpush2.bf16.msra.mxu0 0
        %902 = vmatprep.subr.bf16.mxu0 0
        %903 = vmatpush2.bf16.msra.mxu0 0
        %904 = vmatprep.mubr.bf16.mxu0 0
        %905 = vmatmul.mubr.bf16.gmra.mxu0 %v820
        %v906 = vpop.f32.mrf.mxu0
        %v907 = vadd.f32 0.0, %v906
        %v908 = vpop.f32.mrf.mxu0
        %v909 = vpop.f32.mrf.mxu0
        %v910 = vadd.f32 0.0, %v909
        %v911 = vpop.f32.mrf.mxu0
        %912 = vmatprep.mubr.bf16.mxu0 0
        %913 = vmatmul.mubr.bf16.gmra.mxu0 %v821
        %v914 = vpop.f32.mrf.mxu0
        %v915 = vadd.f32 0.0, %v914
        %v916 = vpop.f32.mrf.mxu0
        %v917 = vpop.f32.mrf.mxu0
        %v918 = vpop.f32.mrf.mxu0
        %919 = vdwg.mxu0
        %v920 = vadd.f32 %v791, %v907
        %v921 = vadd.f32 %v792, %v910
        %v922 = vadd.f32 %v793, %v915
        %v923 = vld [vmem:[%s395] sm:$0xf]
        %v924 = vld [vmem:[%s395 + $0x4] sm:$0xf]
        %v925 = vld [vmem:[%s395 + $0x8] sm:$0x3]
        %s926 = scalar_lea.vmem [#allocation2], 256
        %v927 = vld [vmem:[%s926] sm:$0xf]
        %v928 = vld [vmem:[%s926 + $0x4] sm:$0xf]
        %v929 = vld [vmem:[%s926 + $0x8] sm:$0xf]
        %v930 = vld [vmem:[%s926 + $0xc] sm:$0xf]
        %v931 = vld [vmem:[%s926 + $0x10] sm:$0xf]
        %v932 = vld [vmem:[%s926 + $0x14] sm:$0xf]
        %v933 = vld [vmem:[%s926 + $0x18] sm:$0xf]
        %v934 = vld [vmem:[%s926 + $0x1c] sm:$0xf]
        %v935 = vld [vmem:[%s926 + $0x20] sm:$0xf]
        %v936 = vld [vmem:[%s926 + $0x24] sm:$0xf]
        %v937 = vld [vmem:[%s926 + $0x28] sm:$0xf]
        %v938 = vld [vmem:[%s926 + $0x2c] sm:$0xf]
        %v939 = vld [vmem:[%s926 + $0x30] sm:$0xf]
        %v940 = vld [vmem:[%s926 + $0x34] sm:$0xf]
        %v941 = vld [vmem:[%s926 + $0x38] sm:$0xf]
        %v942 = vld [vmem:[%s926 + $0x3c] sm:$0xf]
        %v946 = vunpack.c.l.b16 %v923
        %v947 = vunpack.c.l.b16 %v924
        %v948 = vunpack.c.l.b16 %v925
        %v949 = vpack.c.b16 %v947, %v946
        %v950 = vpack.c.b16 %v948, %v948
        %v969 = vunpack.c.l.b16 %v927
        %v970 = vunpack.c.l.b16 %v928
        %v971 = vunpack.c.l.b16 %v929
        %v972 = vunpack.c.l.b16 %v930
        %v973 = vunpack.c.l.b16 %v931
        %v974 = vunpack.c.l.b16 %v932
        %v975 = vunpack.c.l.b16 %v933
        %v976 = vunpack.c.l.b16 %v934
        %v977 = vunpack.c.l.b16 %v935
        %v978 = vunpack.c.l.b16 %v936
        %v979 = vunpack.c.l.b16 %v937
        %v980 = vunpack.c.l.b16 %v938
        %v981 = vunpack.c.l.b16 %v939
        %v982 = vunpack.c.l.b16 %v940
        %v983 = vunpack.c.l.b16 %v941
        %v984 = vunpack.c.l.b16 %v942
        %v985 = vpack.c.b16 %v970, %v969
        %v986 = vpack.c.b16 %v972, %v971
        %v987 = vpack.c.b16 %v974, %v973
        %v988 = vpack.c.b16 %v976, %v975
        %v989 = vpack.c.b16 %v978, %v977
        %v990 = vpack.c.b16 %v980, %v979
        %v991 = vpack.c.b16 %v982, %v981
        %v992 = vpack.c.b16 %v984, %v983
        %1001 = vmatprep.subr.bf16.mxu0 0
        %1002 = vmatpush1.bf16.msra.mxu0 %v992
        %1003 = vmatprep.subr.bf16.mxu0 0
        %1004 = vmatpush1.bf16.msra.mxu0 %v991
        %1005 = vmatprep.subr.bf16.mxu0 0
        %1006 = vmatpush1.bf16.msra.mxu0 %v990
        %1007 = vmatprep.subr.bf16.mxu0 0
        %1008 = vmatpush1.bf16.msra.mxu0 %v989
        %1009 = vmatprep.subr.bf16.mxu0 0
        %1010 = vmatpush1.bf16.msra.mxu0 %v988
        %1011 = vmatprep.subr.bf16.mxu0 0
        %1012 = vmatpush1.bf16.msra.mxu0 %v987
        %1013 = vmatprep.subr.bf16.mxu0 0
        %1014 = vmatpush1.bf16.msra.mxu0 %v986
        %1015 = vmatprep.subr.bf16.mxu0 0
        %1016 = vmatpush1.bf16.msra.mxu0 %v985
        %1017 = vmatprep.subr.bf16.mxu0 0
        %1018 = vmatpush2.bf16.msra.mxu0 0
        %1019 = vmatprep.subr.bf16.mxu0 0
        %1020 = vmatpush2.bf16.msra.mxu0 0
        %1021 = vmatprep.subr.bf16.mxu0 0
        %1022 = vmatpush2.bf16.msra.mxu0 0
        %1023 = vmatprep.subr.bf16.mxu0 0
        %1024 = vmatpush2.bf16.msra.mxu0 0
        %1025 = vmatprep.subr.bf16.mxu0 0
        %1026 = vmatpush2.bf16.msra.mxu0 0
        %1027 = vmatprep.subr.bf16.mxu0 0
        %1028 = vmatpush2.bf16.msra.mxu0 0
        %1029 = vmatprep.subr.bf16.mxu0 0
        %1030 = vmatpush2.bf16.msra.mxu0 0
        %1031 = vmatprep.subr.bf16.mxu0 0
        %1032 = vmatpush2.bf16.msra.mxu0 0
        %1033 = vmatprep.mubr.bf16.mxu0 0
        %1034 = vmatmul.mubr.bf16.gmra.mxu0 %v949
        %v1035 = vpop.f32.mrf.mxu0
        %v1036 = vadd.f32 0.0, %v1035
        %v1037 = vpop.f32.mrf.mxu0
        %v1038 = vpop.f32.mrf.mxu0
        %v1039 = vadd.f32 0.0, %v1038
        %v1040 = vpop.f32.mrf.mxu0
        %1041 = vmatprep.mubr.bf16.mxu0 0
        %1042 = vmatmul.mubr.bf16.gmra.mxu0 %v950
        %v1043 = vpop.f32.mrf.mxu0
        %v1044 = vadd.f32 0.0, %v1043
        %v1045 = vpop.f32.mrf.mxu0
        %v1046 = vpop.f32.mrf.mxu0
        %v1047 = vpop.f32.mrf.mxu0
        %1048 = vdwg.mxu0
        %v1049 = vadd.f32 %v920, %v1036
        %v1050 = vadd.f32 %v921, %v1039
        %v1051 = vadd.f32 %v922, %v1044
        %v1052 = vld [vmem:[%s390 + $0x8] sm:$0x7]
        %s1053 = scalar_lea.vmem [#allocation2], 320
        %v1054 = vld [vmem:[%s1053] sm:$0xf]
        %v1055 = vld [vmem:[%s1053 + $0x4] sm:$0xf]
        %v1056 = vld [vmem:[%s1053 + $0x8] sm:$0xf]
        %v1057 = vld [vmem:[%s1053 + $0xc] sm:$0xf]
        %v1058 = vld [vmem:[%s1053 + $0x10] sm:$0xf]
        %v1059 = vld [vmem:[%s1053 + $0x14] sm:$0xf]
        %v1060 = vld [vmem:[%s1053 + $0x18] sm:$0xf]
        %v1061 = vld [vmem:[%s1053 + $0x1c] sm:$0xf]
        %v1062 = vld [vmem:[%s1053 + $0x20] sm:$0xf]
        %v1063 = vld [vmem:[%s1053 + $0x24] sm:$0xf]
        %v1064 = vld [vmem:[%s1053 + $0x28] sm:$0xf]
        %v1065 = vld [vmem:[%s1053 + $0x2c] sm:$0xf]
        %v1066 = vld [vmem:[%s1053 + $0x30] sm:$0xf]
        %v1067 = vld [vmem:[%s1053 + $0x34] sm:$0xf]
        %v1068 = vld [vmem:[%s1053 + $0x38] sm:$0xf]
        %v1069 = vld [vmem:[%s1053 + $0x3c] sm:$0xf]
        %v1071 = vunpack.c.l.b16 %v1052
        %v1072 = vpack.c.b16 %v1071, %v1071
        %v1074 = vshrl.u32 %v820, 16
        %v1076 = vshll.u32 %v820, 16
        %v1078 = vrot.slane %v1076, 1
        %v1079 = vor.u32 %v1074, %v1078
        %v1081 = vshll.u32 %v1072, 16
        %v1083 = vrot.slane %v1081, 1
        %v1084 = vsel %vm677, %v1079, %v1083
        %v1085 = vshrl.u32 %v1072, 16
        %v1087 = vor.u32 %v1085, %v1083
        %v1106 = vunpack.c.l.b16 %v1054
        %v1107 = vunpack.c.l.b16 %v1055
        %v1108 = vunpack.c.l.b16 %v1056
        %v1109 = vunpack.c.l.b16 %v1057
        %v1110 = vunpack.c.l.b16 %v1058
        %v1111 = vunpack.c.l.b16 %v1059
        %v1112 = vunpack.c.l.b16 %v1060
        %v1113 = vunpack.c.l.b16 %v1061
        %v1114 = vunpack.c.l.b16 %v1062
        %v1115 = vunpack.c.l.b16 %v1063
        %v1116 = vunpack.c.l.b16 %v1064
        %v1117 = vunpack.c.l.b16 %v1065
        %v1118 = vunpack.c.l.b16 %v1066
        %v1119 = vunpack.c.l.b16 %v1067
        %v1120 = vunpack.c.l.b16 %v1068
        %v1121 = vunpack.c.l.b16 %v1069
        %v1122 = vpack.c.b16 %v1107, %v1106
        %v1123 = vpack.c.b16 %v1109, %v1108
        %v1124 = vpack.c.b16 %v1111, %v1110
        %v1125 = vpack.c.b16 %v1113, %v1112
        %v1126 = vpack.c.b16 %v1115, %v1114
        %v1127 = vpack.c.b16 %v1117, %v1116
        %v1128 = vpack.c.b16 %v1119, %v1118
        %v1129 = vpack.c.b16 %v1121, %v1120
        %1138 = vmatprep.subr.bf16.mxu0 0
        %1139 = vmatpush1.bf16.msra.mxu0 %v1129
        %1140 = vmatprep.subr.bf16.mxu0 0
        %1141 = vmatpush1.bf16.msra.mxu0 %v1128
        %1142 = vmatprep.subr.bf16.mxu0 0
        %1143 = vmatpush1.bf16.msra.mxu0 %v1127
        %1144 = vmatprep.subr.bf16.mxu0 0
        %1145 = vmatpush1.bf16.msra.mxu0 %v1126
        %1146 = vmatprep.subr.bf16.mxu0 0
        %1147 = vmatpush1.bf16.msra.mxu0 %v1125
        %1148 = vmatprep.subr.bf16.mxu0 0
        %1149 = vmatpush1.bf16.msra.mxu0 %v1124
        %1150 = vmatprep.subr.bf16.mxu0 0
        %1151 = vmatpush1.bf16.msra.mxu0 %v1123
        %1152 = vmatprep.subr.bf16.mxu0 0
        %1153 = vmatpush1.bf16.msra.mxu0 %v1122
        %1154 = vmatprep.subr.bf16.mxu0 0
        %1155 = vmatpush2.bf16.msra.mxu0 0
        %1156 = vmatprep.subr.bf16.mxu0 0
        %1157 = vmatpush2.bf16.msra.mxu0 0
        %1158 = vmatprep.subr.bf16.mxu0 0
        %1159 = vmatpush2.bf16.msra.mxu0 0
        %1160 = vmatprep.subr.bf16.mxu0 0
        %1161 = vmatpush2.bf16.msra.mxu0 0
        %1162 = vmatprep.subr.bf16.mxu0 0
        %1163 = vmatpush2.bf16.msra.mxu0 0
        %1164 = vmatprep.subr.bf16.mxu0 0
        %1165 = vmatpush2.bf16.msra.mxu0 0
        %1166 = vmatprep.subr.bf16.mxu0 0
        %1167 = vmatpush2.bf16.msra.mxu0 0
        %1168 = vmatprep.subr.bf16.mxu0 0
        %1169 = vmatpush2.bf16.msra.mxu0 0
        %1170 = vmatprep.mubr.bf16.mxu0 0
        %1171 = vmatmul.mubr.bf16.gmra.mxu0 %v1084
        %v1172 = vpop.f32.mrf.mxu0
        %v1173 = vadd.f32 0.0, %v1172
        %v1174 = vpop.f32.mrf.mxu0
        %v1175 = vpop.f32.mrf.mxu0
        %v1176 = vadd.f32 0.0, %v1175
        %v1177 = vpop.f32.mrf.mxu0
        %1178 = vmatprep.mubr.bf16.mxu0 0
        %1179 = vmatmul.mubr.bf16.gmra.mxu0 %v1087
        %v1180 = vpop.f32.mrf.mxu0
        %v1181 = vadd.f32 0.0, %v1180
        %v1182 = vpop.f32.mrf.mxu0
        %v1183 = vpop.f32.mrf.mxu0
        %v1184 = vpop.f32.mrf.mxu0
        %1185 = vdwg.mxu0
        %v1186 = vadd.f32 %v1049, %v1173
        %v1187 = vadd.f32 %v1050, %v1176
        %v1188 = vadd.f32 %v1051, %v1181
        %v1189 = vld [vmem:[%s380] sm:$0xc]
        %v1190 = vld [vmem:[%s380 + $0x4] sm:$0xf]
        %v1191 = vld [vmem:[%s380 + $0x8] sm:$0xf]
        %v1192 = vld [vmem:[%s380 + $0xc] sm:$0x1]
        %s1193 = scalar_lea.vmem [#allocation2], 384
        %v1194 = vld [vmem:[%s1193] sm:$0xf]
        %v1195 = vld [vmem:[%s1193 + $0x4] sm:$0xf]
        %v1196 = vld [vmem:[%s1193 + $0x8] sm:$0xf]
        %v1197 = vld [vmem:[%s1193 + $0xc] sm:$0xf]
        %v1198 = vld [vmem:[%s1193 + $0x10] sm:$0xf]
        %v1199 = vld [vmem:[%s1193 + $0x14] sm:$0xf]
        %v1200 = vld [vmem:[%s1193 + $0x18] sm:$0xf]
        %v1201 = vld [vmem:[%s1193 + $0x1c] sm:$0xf]
        %v1202 = vld [vmem:[%s1193 + $0x20] sm:$0xf]
        %v1203 = vld [vmem:[%s1193 + $0x24] sm:$0xf]
        %v1204 = vld [vmem:[%s1193 + $0x28] sm:$0xf]
        %v1205 = vld [vmem:[%s1193 + $0x2c] sm:$0xf]
        %v1206 = vld [vmem:[%s1193 + $0x30] sm:$0xf]
        %v1207 = vld [vmem:[%s1193 + $0x34] sm:$0xf]
        %v1208 = vld [vmem:[%s1193 + $0x38] sm:$0xf]
        %v1209 = vld [vmem:[%s1193 + $0x3c] sm:$0xf]
        %v1214 = vunpack.c.l.b16 %v1189
        %v1215 = vunpack.c.l.b16 %v1190
        %v1216 = vunpack.c.l.b16 %v1191
        %v1217 = vunpack.c.l.b16 %v1192
        %v1218 = vpack.c.b16 %v1215, %v1214
        %v1219 = vpack.c.b16 %v1217, %v1216
        %vm1220 = vsmask.f32 5376
        %v1222 = vshrl.u32 %v1218, 16
        %v1224 = vrot.slane %v1222, 2
        %v1225 = vshll.u32 %v1218, 16
        %v1227 = vrot.slane %v1225, 3
        %v1228 = vor.u32 %v1224, %v1227
        %v1230 = vshrl.u32 %v1219, 16
        %v1232 = vrot.slane %v1230, 2
        %v1233 = vshll.u32 %v1219, 16
        %v1235 = vrot.slane %v1233, 3
        %v1236 = vor.u32 %v1232, %v1235
        %v1237 = vsel %vm1220, %v1228, %v1236
        %v1256 = vunpack.c.l.b16 %v1194
        %v1257 = vunpack.c.l.b16 %v1195
        %v1258 = vunpack.c.l.b16 %v1196
        %v1259 = vunpack.c.l.b16 %v1197
        %v1260 = vunpack.c.l.b16 %v1198
        %v1261 = vunpack.c.l.b16 %v1199
        %v1262 = vunpack.c.l.b16 %v1200
        %v1263 = vunpack.c.l.b16 %v1201
        %v1264 = vunpack.c.l.b16 %v1202
        %v1265 = vunpack.c.l.b16 %v1203
        %v1266 = vunpack.c.l.b16 %v1204
        %v1267 = vunpack.c.l.b16 %v1205
        %v1268 = vunpack.c.l.b16 %v1206
        %v1269 = vunpack.c.l.b16 %v1207
        %v1270 = vunpack.c.l.b16 %v1208
        %v1271 = vunpack.c.l.b16 %v1209
        %v1272 = vpack.c.b16 %v1257, %v1256
        %v1273 = vpack.c.b16 %v1259, %v1258
        %v1274 = vpack.c.b16 %v1261, %v1260
        %v1275 = vpack.c.b16 %v1263, %v1262
        %v1276 = vpack.c.b16 %v1265, %v1264
        %v1277 = vpack.c.b16 %v1267, %v1266
        %v1278 = vpack.c.b16 %v1269, %v1268
        %v1279 = vpack.c.b16 %v1271, %v1270
        %1288 = vmatprep.subr.bf16.mxu0 0
        %1289 = vmatpush1.bf16.msra.mxu0 %v1279
        %1290 = vmatprep.subr.bf16.mxu0 0
        %1291 = vmatpush1.bf16.msra.mxu0 %v1278
        %1292 = vmatprep.subr.bf16.mxu0 0
        %1293 = vmatpush1.bf16.msra.mxu0 %v1277
        %1294 = vmatprep.subr.bf16.mxu0 0
        %1295 = vmatpush1.bf16.msra.mxu0 %v1276
        %1296 = vmatprep.subr.bf16.mxu0 0
        %1297 = vmatpush1.bf16.msra.mxu0 %v1275
        %1298 = vmatprep.subr.bf16.mxu0 0
        %1299 = vmatpush1.bf16.msra.mxu0 %v1274
        %1300 = vmatprep.subr.bf16.mxu0 0
        %1301 = vmatpush1.bf16.msra.mxu0 %v1273
        %1302 = vmatprep.subr.bf16.mxu0 0
        %1303 = vmatpush1.bf16.msra.mxu0 %v1272
        %1304 = vmatprep.subr.bf16.mxu0 0
        %1305 = vmatpush2.bf16.msra.mxu0 0
        %1306 = vmatprep.subr.bf16.mxu0 0
        %1307 = vmatpush2.bf16.msra.mxu0 0
        %1308 = vmatprep.subr.bf16.mxu0 0
        %1309 = vmatpush2.bf16.msra.mxu0 0
        %1310 = vmatprep.subr.bf16.mxu0 0
        %1311 = vmatpush2.bf16.msra.mxu0 0
        %1312 = vmatprep.subr.bf16.mxu0 0
        %1313 = vmatpush2.bf16.msra.mxu0 0
        %1314 = vmatprep.subr.bf16.mxu0 0
        %1315 = vmatpush2.bf16.msra.mxu0 0
        %1316 = vmatprep.subr.bf16.mxu0 0
        %1317 = vmatpush2.bf16.msra.mxu0 0
        %1318 = vmatprep.subr.bf16.mxu0 0
        %1319 = vmatpush2.bf16.msra.mxu0 0
        %1320 = vmatprep.mubr.bf16.mxu0 0
        %1321 = vmatmul.mubr.bf16.gmra.mxu0 %v1237
        %v1322 = vpop.f32.mrf.mxu0
        %v1323 = vadd.f32 0.0, %v1322
        %v1324 = vpop.f32.mrf.mxu0
        %v1325 = vpop.f32.mrf.mxu0
        %v1326 = vadd.f32 0.0, %v1325
        %v1327 = vpop.f32.mrf.mxu0
        %1328 = vmatprep.mubr.bf16.mxu0 0
        %1329 = vmatmul.mubr.bf16.gmra.mxu0 %v1236
        %v1330 = vpop.f32.mrf.mxu0
        %v1331 = vadd.f32 0.0, %v1330
        %v1332 = vpop.f32.mrf.mxu0
        %v1333 = vpop.f32.mrf.mxu0
        %v1334 = vpop.f32.mrf.mxu0
        %1335 = vdwg.mxu0
        %v1336 = vadd.f32 %v1186, %v1323
        %v1337 = vadd.f32 %v1187, %v1326
        %v1338 = vadd.f32 %v1188, %v1331
        %v1339 = vld [vmem:[%s385] sm:$0xc]
        %v1340 = vld [vmem:[%s385 + $0x4] sm:$0xf]
        %v1341 = vld [vmem:[%s385 + $0x8] sm:$0xf]
        %v1342 = vld [vmem:[%s385 + $0xc] sm:$0x1]
        %s1343 = scalar_lea.vmem [#allocation2], 448
        %v1344 = vld [vmem:[%s1343] sm:$0xf]
        %v1345 = vld [vmem:[%s1343 + $0x4] sm:$0xf]
        %v1346 = vld [vmem:[%s1343 + $0x8] sm:$0xf]
        %v1347 = vld [vmem:[%s1343 + $0xc] sm:$0xf]
        %v1348 = vld [vmem:[%s1343 + $0x10] sm:$0xf]
        %v1349 = vld [vmem:[%s1343 + $0x14] sm:$0xf]
        %v1350 = vld [vmem:[%s1343 + $0x18] sm:$0xf]
        %v1351 = vld [vmem:[%s1343 + $0x1c] sm:$0xf]
        %v1352 = vld [vmem:[%s1343 + $0x20] sm:$0xf]
        %v1353 = vld [vmem:[%s1343 + $0x24] sm:$0xf]
        %v1354 = vld [vmem:[%s1343 + $0x28] sm:$0xf]
        %v1355 = vld [vmem:[%s1343 + $0x2c] sm:$0xf]
        %v1356 = vld [vmem:[%s1343 + $0x30] sm:$0xf]
        %v1357 = vld [vmem:[%s1343 + $0x34] sm:$0xf]
        %v1358 = vld [vmem:[%s1343 + $0x38] sm:$0xf]
        %v1359 = vld [vmem:[%s1343 + $0x3c] sm:$0xf]
        %v1364 = vunpack.c.l.b16 %v1339
        %v1365 = vunpack.c.l.b16 %v1340
        %v1366 = vunpack.c.l.b16 %v1341
        %v1367 = vunpack.c.l.b16 %v1342
        %v1368 = vpack.c.b16 %v1365, %v1364
        %v1369 = vpack.c.b16 %v1367, %v1366
        %v1371 = vshrl.u32 %v1368, 16
        %v1373 = vrot.slane %v1371, 2
        %v1374 = vshll.u32 %v1368, 16
        %v1376 = vrot.slane %v1374, 3
        %v1377 = vor.u32 %v1373, %v1376
        %v1379 = vshrl.u32 %v1369, 16
        %v1381 = vrot.slane %v1379, 2
        %v1382 = vshll.u32 %v1369, 16
        %v1384 = vrot.slane %v1382, 3
        %v1385 = vor.u32 %v1381, %v1384
        %v1386 = vsel %vm1220, %v1377, %v1385
        %v1405 = vunpack.c.l.b16 %v1344
        %v1406 = vunpack.c.l.b16 %v1345
        %v1407 = vunpack.c.l.b16 %v1346
        %v1408 = vunpack.c.l.b16 %v1347
        %v1409 = vunpack.c.l.b16 %v1348
        %v1410 = vunpack.c.l.b16 %v1349
        %v1411 = vunpack.c.l.b16 %v1350
        %v1412 = vunpack.c.l.b16 %v1351
        %v1413 = vunpack.c.l.b16 %v1352
        %v1414 = vunpack.c.l.b16 %v1353
        %v1415 = vunpack.c.l.b16 %v1354
        %v1416 = vunpack.c.l.b16 %v1355
        %v1417 = vunpack.c.l.b16 %v1356
        %v1418 = vunpack.c.l.b16 %v1357
        %v1419 = vunpack.c.l.b16 %v1358
        %v1420 = vunpack.c.l.b16 %v1359
        %v1421 = vpack.c.b16 %v1406, %v1405
        %v1422 = vpack.c.b16 %v1408, %v1407
        %v1423 = vpack.c.b16 %v1410, %v1409
        %v1424 = vpack.c.b16 %v1412, %v1411
        %v1425 = vpack.c.b16 %v1414, %v1413
        %v1426 = vpack.c.b16 %v1416, %v1415
        %v1427 = vpack.c.b16 %v1418, %v1417
        %v1428 = vpack.c.b16 %v1420, %v1419
        %1437 = vmatprep.subr.bf16.mxu0 0
        %1438 = vmatpush1.bf16.msra.mxu0 %v1428
        %1439 = vmatprep.subr.bf16.mxu0 0
        %1440 = vmatpush1.bf16.msra.mxu0 %v1427
        %1441 = vmatprep.subr.bf16.mxu0 0
        %1442 = vmatpush1.bf16.msra.mxu0 %v1426
        %1443 = vmatprep.subr.bf16.mxu0 0
        %1444 = vmatpush1.bf16.msra.mxu0 %v1425
        %1445 = vmatprep.subr.bf16.mxu0 0
        %1446 = vmatpush1.bf16.msra.mxu0 %v1424
        %1447 = vmatprep.subr.bf16.mxu0 0
        %1448 = vmatpush1.bf16.msra.mxu0 %v1423
        %1449 = vmatprep.subr.bf16.mxu0 0
        %1450 = vmatpush1.bf16.msra.mxu0 %v1422
        %1451 = vmatprep.subr.bf16.mxu0 0
        %1452 = vmatpush1.bf16.msra.mxu0 %v1421
        %1453 = vmatprep.subr.bf16.mxu0 0
        %1454 = vmatpush2.bf16.msra.mxu0 0
        %1455 = vmatprep.subr.bf16.mxu0 0
        %1456 = vmatpush2.bf16.msra.mxu0 0
        %1457 = vmatprep.subr.bf16.mxu0 0
        %1458 = vmatpush2.bf16.msra.mxu0 0
        %1459 = vmatprep.subr.bf16.mxu0 0
        %1460 = vmatpush2.bf16.msra.mxu0 0
        %1461 = vmatprep.subr.bf16.mxu0 0
        %1462 = vmatpush2.bf16.msra.mxu0 0
        %1463 = vmatprep.subr.bf16.mxu0 0
        %1464 = vmatpush2.bf16.msra.mxu0 0
        %1465 = vmatprep.subr.bf16.mxu0 0
        %1466 = vmatpush2.bf16.msra.mxu0 0
        %1467 = vmatprep.subr.bf16.mxu0 0
        %1468 = vmatpush2.bf16.msra.mxu0 0
        %1469 = vmatprep.mubr.bf16.mxu0 0
        %1470 = vmatmul.mubr.bf16.gmra.mxu0 %v1386
        %v1471 = vpop.f32.mrf.mxu0
        %v1472 = vadd.f32 0.0, %v1471
        %v1473 = vpop.f32.mrf.mxu0
        %v1474 = vpop.f32.mrf.mxu0
        %v1475 = vadd.f32 0.0, %v1474
        %v1476 = vpop.f32.mrf.mxu0
        %1477 = vmatprep.mubr.bf16.mxu0 0
        %1478 = vmatmul.mubr.bf16.gmra.mxu0 %v1385
        %v1479 = vpop.f32.mrf.mxu0
        %v1480 = vadd.f32 0.0, %v1479
        %v1481 = vpop.f32.mrf.mxu0
        %v1482 = vpop.f32.mrf.mxu0
        %v1483 = vpop.f32.mrf.mxu0
        %1484 = vdwg.mxu0
        %v1485 = vadd.f32 %v1336, %v1472
        %v1486 = vadd.f32 %v1337, %v1475
        %v1487 = vadd.f32 %v1338, %v1480
        %v1488 = vld [vmem:[%s380] sm:$0x8]
        %s1489 = scalar_lea.vmem [#allocation2], 512
        %v1490 = vld [vmem:[%s1489] sm:$0xf]
        %v1491 = vld [vmem:[%s1489 + $0x4] sm:$0xf]
        %v1492 = vld [vmem:[%s1489 + $0x8] sm:$0xf]
        %v1493 = vld [vmem:[%s1489 + $0xc] sm:$0xf]
        %v1494 = vld [vmem:[%s1489 + $0x10] sm:$0xf]
        %v1495 = vld [vmem:[%s1489 + $0x14] sm:$0xf]
        %v1496 = vld [vmem:[%s1489 + $0x18] sm:$0xf]
        %v1497 = vld [vmem:[%s1489 + $0x1c] sm:$0xf]
        %v1498 = vld [vmem:[%s1489 + $0x20] sm:$0xf]
        %v1499 = vld [vmem:[%s1489 + $0x24] sm:$0xf]
        %v1500 = vld [vmem:[%s1489 + $0x28] sm:$0xf]
        %v1501 = vld [vmem:[%s1489 + $0x2c] sm:$0xf]
        %v1502 = vld [vmem:[%s1489 + $0x30] sm:$0xf]
        %v1503 = vld [vmem:[%s1489 + $0x34] sm:$0xf]
        %v1504 = vld [vmem:[%s1489 + $0x38] sm:$0xf]
        %v1505 = vld [vmem:[%s1489 + $0x3c] sm:$0xf]
        %v1507 = vunpack.c.l.b16 %v1488
        %v1508 = vpack.c.b16 %v1215, %v1507
        %vm1509 = vcmask 1044480
        %v1510 = vrot.slane %v1508, 3
        %v1511 = vrot.slane %v1219, 3
        %v1512 = vsel %vm1509, %v1510, %v1511
        %v1531 = vunpack.c.l.b16 %v1490
        %v1532 = vunpack.c.l.b16 %v1491
        %v1533 = vunpack.c.l.b16 %v1492
        %v1534 = vunpack.c.l.b16 %v1493
        %v1535 = vunpack.c.l.b16 %v1494
        %v1536 = vunpack.c.l.b16 %v1495
        %v1537 = vunpack.c.l.b16 %v1496
        %v1538 = vunpack.c.l.b16 %v1497
        %v1539 = vunpack.c.l.b16 %v1498
        %v1540 = vunpack.c.l.b16 %v1499
        %v1541 = vunpack.c.l.b16 %v1500
        %v1542 = vunpack.c.l.b16 %v1501
        %v1543 = vunpack.c.l.b16 %v1502
        %v1544 = vunpack.c.l.b16 %v1503
        %v1545 = vunpack.c.l.b16 %v1504
        %v1546 = vunpack.c.l.b16 %v1505
        %v1547 = vpack.c.b16 %v1532, %v1531
        %v1548 = vpack.c.b16 %v1534, %v1533
        %v1549 = vpack.c.b16 %v1536, %v1535
        %v1550 = vpack.c.b16 %v1538, %v1537
        %v1551 = vpack.c.b16 %v1540, %v1539
        %v1552 = vpack.c.b16 %v1542, %v1541
        %v1553 = vpack.c.b16 %v1544, %v1543
        %v1554 = vpack.c.b16 %v1546, %v1545
        %1563 = vmatprep.subr.bf16.mxu0 0
        %1564 = vmatpush1.bf16.msra.mxu0 %v1554
        %1565 = vmatprep.subr.bf16.mxu0 0
        %1566 = vmatpush1.bf16.msra.mxu0 %v1553
        %1567 = vmatprep.subr.bf16.mxu0 0
        %1568 = vmatpush1.bf16.msra.mxu0 %v1552
        %1569 = vmatprep.subr.bf16.mxu0 0
        %1570 = vmatpush1.bf16.msra.mxu0 %v1551
        %1571 = vmatprep.subr.bf16.mxu0 0
        %1572 = vmatpush1.bf16.msra.mxu0 %v1550
        %1573 = vmatprep.subr.bf16.mxu0 0
        %1574 = vmatpush1.bf16.msra.mxu0 %v1549
        %1575 = vmatprep.subr.bf16.mxu0 0
        %1576 = vmatpush1.bf16.msra.mxu0 %v1548
        %1577 = vmatprep.subr.bf16.mxu0 0
        %1578 = vmatpush1.bf16.msra.mxu0 %v1547
        %1579 = vmatprep.subr.bf16.mxu0 0
        %1580 = vmatpush2.bf16.msra.mxu0 0
        %1581 = vmatprep.subr.bf16.mxu0 0
        %1582 = vmatpush2.bf16.msra.mxu0 0
        %1583 = vmatprep.subr.bf16.mxu0 0
        %1584 = vmatpush2.bf16.msra.mxu0 0
        %1585 = vmatprep.subr.bf16.mxu0 0
        %1586 = vmatpush2.bf16.msra.mxu0 0
        %1587 = vmatprep.subr.bf16.mxu0 0
        %1588 = vmatpush2.bf16.msra.mxu0 0
        %1589 = vmatprep.subr.bf16.mxu0 0
        %1590 = vmatpush2.bf16.msra.mxu0 0
        %1591 = vmatprep.subr.bf16.mxu0 0
        %1592 = vmatpush2.bf16.msra.mxu0 0
        %1593 = vmatprep.subr.bf16.mxu0 0
        %1594 = vmatpush2.bf16.msra.mxu0 0
        %1595 = vmatprep.mubr.bf16.mxu0 0
        %1596 = vmatmul.mubr.bf16.gmra.mxu0 %v1512
        %v1597 = vpop.f32.mrf.mxu0
        %v1598 = vadd.f32 0.0, %v1597
        %v1599 = vpop.f32.mrf.mxu0
        %v1600 = vpop.f32.mrf.mxu0
        %v1601 = vadd.f32 0.0, %v1600
        %v1602 = vpop.f32.mrf.mxu0
        %1603 = vmatprep.mubr.bf16.mxu0 0
        %1604 = vmatmul.mubr.bf16.gmra.mxu0 %v1511
        %v1605 = vpop.f32.mrf.mxu0
        %v1606 = vadd.f32 0.0, %v1605
        %v1607 = vpop.f32.mrf.mxu0
        %v1608 = vpop.f32.mrf.mxu0
        %v1609 = vpop.f32.mrf.mxu0
        %1610 = vdwg.mxu0
        %v1611 = vadd.f32 %v1485, %v1598
        %v1612 = vadd.f32 %v1486, %v1601
        %v1613 = vadd.f32 %v1487, %v1606
        %v1614 = vlaneseq
        %v1615 = vshrl.u32 %v1614, 7
        %v1616 = vadd.s32 %v1615, 8
        %v1617 = vadd.s32 %v1615, 16
        %vm1618 = vcmp.lt.s32.totalorder %v1615, 0
        %v1619 = vsub.s32 0, %v1615
        %v1620 = vsel %vm1618, %v1619, %v1615
        %v1621 = vmul.u32.u64.compose %v1620, 3435973837
        %v1622 = vextract.low.u32 %v1621
        %v1623 = vextract.high.u32 %v1621
        %v1624 = vshrl.u32 %v1623, 2
        %v1625 = vmul.u32 %v1624, 5
        %v1626 = vsub.s32 %v1620, %v1625
        %v1627 = vsub.s32 0, %v1626
        %v1628 = vsel %vm1618, %v1627, %v1626
        %vm1629 = vcmp.lt.s32.totalorder %v1616, 0
        %v1630 = vsub.s32 0, %v1616
        %v1631 = vsel %vm1629, %v1630, %v1616
        %v1632 = vmul.u32.u64.compose %v1631, 3435973837
        %v1633 = vextract.low.u32 %v1632
        %v1634 = vextract.high.u32 %v1632
        %v1635 = vshrl.u32 %v1634, 2
        %v1636 = vmul.u32 %v1635, 5
        %v1637 = vsub.s32 %v1631, %v1636
        %v1638 = vsub.s32 0, %v1637
        %v1639 = vsel %vm1629, %v1638, %v1637
        %vm1640 = vcmp.lt.s32.totalorder %v1617, 0
        %v1641 = vsub.s32 0, %v1617
        %v1642 = vsel %vm1640, %v1641, %v1617
        %v1643 = vmul.u32.u64.compose %v1642, 3435973837
        %v1644 = vextract.low.u32 %v1643
        %v1645 = vextract.high.u32 %v1643
        %v1646 = vshrl.u32 %v1645, 2
        %v1647 = vmul.u32 %v1646, 5
        %v1648 = vsub.s32 %v1642, %v1647
        %v1649 = vsub.s32 0, %v1648
        %v1650 = vsel %vm1640, %v1649, %v1648
        %vm1651 = vcmp.ne.s32.totalorder %v1628, 0
        %vm1652 = vcmp.ne.s32.totalorder %v1639, 0
        %vm1653 = vcmp.ne.s32.totalorder %v1650, 0
        %vm1654 = vcmp.lt.s32.totalorder %v1628, 0
        %vm1655 = vcmp.lt.s32.totalorder %v1639, 0
        %vm1656 = vcmp.lt.s32.totalorder %v1650, 0
        %vm1657 = vmand %vm1654, %vm1651
        %vm1658 = vmand %vm1655, %vm1652
        %vm1659 = vmand %vm1656, %vm1653
        %v1660 = vadd.s32 %v1628, 5
        %v1661 = vadd.s32 %v1639, 5
        %v1662 = vadd.s32 %v1650, 5
        %v1663 = vsel %vm1657, %v1660, %v1628
        %v1664 = vsel %vm1658, %v1661, %v1639
        %v1665 = vsel %vm1659, %v1662, %v1650
        %vm1666 = vcmp.lt.s32.totalorder %v1663, 4
        %vm1667 = vcmp.lt.s32.totalorder %v1664, 4
        %vm1668 = vcmp.lt.s32.totalorder %v1665, 4
        %v1669 = vsel %vm1666, 1, 0
        %v1670 = vsel %vm1667, 1, 0
        %v1671 = vsel %vm1668, 1, 0
        %vm1672 = vcmp.eq.s32.totalorder %v1669, 1
        %vm1673 = vcmp.eq.s32.totalorder %v1670, 1
        %vm1674 = vcmp.eq.s32.totalorder %v1671, 1
        %v1675 = vsel %vm1672, %v1611, 0.0
        %v1676 = vsel %vm1673, %v1612, 0.0
        %v1677 = vsel %vm1674, %v1613, 0.0
        %v1678 = vpack.c.bf16 %v1676, %v1675
        %v1679 = vpack.c.bf16 %v1677, %v1677
        %v1682 = vunpack.c.l.b16 %v1678
        %v1683 = vunpack.c.h.b16 %v1678
        %v1684 = vunpack.c.l.b16 %v1679
        %v1685 = vpack.c.b16 %v1682, %v1682
        %v1686 = vpack.c.b16 %v1683, %v1683
        %v1687 = vpack.c.b16 %v1684, %v1684
        %1691 = vst [vmem:[%s403] sm:$0xf] %v1685
        %1692 = vst [vmem:[%s403 + $0x4] sm:$0xf] %v1686
        %1693 = vst [vmem:[%s403 + $0x8] sm:$0x3] %v1687
        %v1694 = vadd.f32 %v1675, %v1676
        %vm1695 = vcmask 1043456
        %v1696 = vsel %vm1695, %v1677, 0.0
        %v1697 = vadd.f32 %v1694, %v1696
        %v1698 = vrot.slane %v1697, 4
        %v1699 = vadd.f32 %v1697, %v1698
        %v1700 = vrot.slane %v1699, 2
        %v1701 = vadd.f32 %v1699, %v1700
        %v1702 = vrot.slane %v1701, 1
        %v1703 = vadd.f32 %v1701, %v1702
        %1704 = vst [vmem:[%s369] sm:$0x1] %v1703
        %v1705 = vmul.f32 %v1675, %v1675
        %v1706 = vmul.f32 %v1676, %v1676
        %v1707 = vmul.f32 %v1677, %v1677
        %v1708 = vadd.f32 %v1705, %v1706
        %v1709 = vsel %vm1695, %v1707, 0.0
        %v1710 = vadd.f32 %v1708, %v1709
        %v1711 = vrot.slane %v1710, 4
        %v1712 = vadd.f32 %v1710, %v1711
        %v1713 = vrot.slane %v1712, 2
        %v1714 = vadd.f32 %v1712, %v1713
        %v1715 = vrot.slane %v1714, 1
        %v1716 = vadd.f32 %v1714, %v1715
        %1717 = vst [vmem:[%s375] sm:$0x1] %v1716
        %p1718 = scmp.lt.s32.totalorder %s30, 1
        %s1719 = scalar_select %p1718, %s30, 1
        %p1720 = scmp.lt.s32.totalorder %s31, 0
        %s1721 = scalar_select %p1720, %s31, 0
        %s1722 = smul.addr %s1719, 3
        %s1723 = sadd.s32 %s1721, %s1722
        %s1724 = smul.addr %s1723, 4
        %s1725 = scalar_lea.vmem %s5, %s1724
        %s1726 = sand.u32 %s206, 1
        %s1727 = scalar_lea.sflag [#allocation4], %s1726
        %s1728 = sand.u32 %s206, 1
        %s1729 = scalar_lea.vmem [#allocation5], %s1728
        %s1730 = sand.u32 %s234, 1
        %s1731 = scalar_lea.sflag [#allocation7], %s1730
        %s1732 = sand.u32 %s234, 1
        %s1733 = scalar_lea.vmem [#allocation6], %s1732
        // Predicated region
        $region45: #{tpu_custom_call.1} parent=39 // pred_check
          %p1734 = pneg %p188
        $region46: #{tpu_custom_call.1} parent=39 // pred_check_branch
          %1736 = sbr.rel (%p1734) target = $region48
        $region47: #{tpu_custom_call.1} parent=39 // pred_region
          _
        $region48: #{tpu_custom_call.1} parent=39 // pred_fallthru
          _
        // Predicated region
        $region49: #{tpu_custom_call.1} parent=39 // pred_check
          %p1737 = pneg %p216
        $region50: #{tpu_custom_call.1} parent=39 // pred_check_branch
          %1739 = sbr.rel (%p1737) target = $region52
        $region51: #{tpu_custom_call.1} parent=39 // pred_region
          %s1741 = ssub.s32 16, 16
          %1742 = vsyncadd %s1727, %s1741
          %s1743 = sadd.s32 %s31, %s30
          %s1744 = smul.addr %s1743, 16
          %s1745 = scalar_lea.hbm %s6, %s1744
          %s1747 = sshll.u32 %s1729, 4
          %s1748 = int_to_ptr.vmem [resolvable:$true] %s1747
          %1750 = dma.vmem_to_hbm [thread:$0]  %s1748, 16, %s1745, %s1727
        $region52: #{tpu_custom_call.1} parent=39 // pred_fallthru
          _
        // Predicated region
        $region53: #{tpu_custom_call.1} parent=39 // pred_check
          %p1751 = pneg %p244
        $region54: #{tpu_custom_call.1} parent=39 // pred_check_branch
          %1753 = sbr.rel (%p1751) target = $region56
        $region55: #{tpu_custom_call.1} parent=39 // pred_region
          %s1755 = ssub.s32 16, 16
          %1756 = vsyncadd %s1731, %s1755
          %s1757 = sadd.s32 %s31, %s30
          %s1758 = smul.addr %s1757, 16
          %s1759 = scalar_lea.hbm %s7, %s1758
          %s1761 = sshll.u32 %s1733, 4
          %s1762 = int_to_ptr.vmem [resolvable:$true] %s1761
          %1764 = dma.vmem_to_hbm [thread:$0]  %s1762, 16, %s1759, %s1731
        $region56: #{tpu_custom_call.1} parent=39 // pred_fallthru
          _
      $region40: #{tpu_custom_call.1} parent=5 // pred_fallthru
        _
      %p1765 = scmp.le.s32.totalorder 2, %s21
      // Predicated region
      $region57: #{tpu_custom_call.1} parent=5 // pred_check
        %p1766 = pneg %p1765
      $region58: #{tpu_custom_call.1} parent=5 // pred_check_branch
        %1768 = sbr.rel (%p1766) target = $region60
      $region59: #{tpu_custom_call.1} parent=5 // pred_region
        %s1769 = ssub.s32 %s21, 2
        // Predicated region
        $region61: #{tpu_custom_call.1} parent=59 // pred_check
          %p1770 = pneg %p194
        $region62: #{tpu_custom_call.1} parent=59 // pred_check_branch
          %1772 = sbr.rel (%p1770) target = $region64
        $region63: #{tpu_custom_call.1} parent=59 // pred_region
          %p1773 = scmp.lt.s32.totalorder %s32, 1
          %s1774 = scalar_select %p1773, %s32, 1
          %p1775 = scmp.lt.s32.totalorder %s33, 0
          %s1776 = scalar_select %p1775, %s33, 0
          %s1777 = smul.addr %s1774, 3
          %s1778 = sadd.s32 %s1776, %s1777
          %s1779 = smul.addr %s1778, 4
          %s1780 = scalar_lea.vmem %s5, %s1779
        $region64: #{tpu_custom_call.1} parent=59 // pred_fallthru
          _
        // Predicated region
        $region65: #{tpu_custom_call.1} parent=59 // pred_check
          %p1781 = pneg %p222
        $region66: #{tpu_custom_call.1} parent=59 // pred_check_branch
          %1783 = sbr.rel (%p1781) target = $region68
        $region67: #{tpu_custom_call.1} parent=59 // pred_region
          %s1784 = sand.u32 %s207, 1
          %s1785 = scalar_lea.sflag [#allocation4], %s1784
          %s1786 = sand.u32 %s207, 1
          %s1787 = scalar_lea.vmem [#allocation5], %s1786
          %1788 = dma.done %s1785, 16
        $region68: #{tpu_custom_call.1} parent=59 // pred_fallthru
          _
        // Predicated region
        $region69: #{tpu_custom_call.1} parent=59 // pred_check
          %p1789 = pneg %p250
        $region70: #{tpu_custom_call.1} parent=59 // pred_check_branch
          %1791 = sbr.rel (%p1789) target = $region72
        $region71: #{tpu_custom_call.1} parent=59 // pred_region
          %s1792 = sand.u32 %s235, 1
          %s1793 = scalar_lea.sflag [#allocation7], %s1792
          %s1794 = sand.u32 %s235, 1
          %s1795 = scalar_lea.vmem [#allocation6], %s1794
          %1796 = dma.done %s1793, 16
        $region72: #{tpu_custom_call.1} parent=59 // pred_fallthru
          _
      $region60: #{tpu_custom_call.1} parent=5 // pred_fallthru
        _
    $region6: #{tpu_custom_call.1} parent=1 // loop_footer
      %s25 = sadd.s32 1, %s21
    $region7: #{tpu_custom_call.1} parent=1 // loop_footer_branch
      %20 = sbr.rel target = $region3
    $region8: #{tpu_custom_call.1} parent=1 // loop_exit
      _
    %1797 = vsyncpa [#allocation3], 1
    %s1798 = scalar_lea.sflag [#allocation3], 1
    %1799 = vsyncpa %s1798, 1
    %1800 = vsyncpa [#allocation4], 1
    %s1801 = scalar_lea.sflag [#allocation4], 1
    %1802 = vsyncpa %s1801, 1
    %1803 = vsyncpa [#allocation7], 1
    %s1804 = scalar_lea.sflag [#allocation7], 1
    %1805 = vsyncpa %s1804, 1

</llo_original>
